<compile_context>
chip_gen: v6e
topology: v6e:2x2x1
jax: 0.10.0
libtpu: 0.0.40
codegen_flags: <defaults>
</compile_context>

<pallas_src>
import functools

import jax
import jax.numpy as jnp
from jax import lax
from jax.experimental import pallas as pl
from jax.experimental.pallas import tpu as pltpu


def _fused_mlp_kernel(x_ref, *refs, num_layers, nb, small_k_max=8):
    """Fused MLP over a block of `nb` batch elements.

    x_ref : (nb, C_in, HW)            activations, pixels on the lane axis
    refs  : w1, b1, ..., wL, bL, o_ref
            w_i : (C_out_i, C_in_i)   (PyTorch Conv2d weight, 1x1 dims squeezed)
            b_i : (C_out_i, 1)
    o_ref : (nb, C_out_L, HW)
    """
    o_ref = refs[-1]
    param_refs = refs[:-1]

    def compute_one(b):
        h = x_ref[b].astype(jnp.float32)          # (C_in, HW), stays in VMEM
        for i in range(num_layers):
            w = param_refs[2 * i][...]            # (C_out, C_in)
            bias = param_refs[2 * i + 1][...]     # (C_out, 1)
            c_out, c_in = w.shape
            if min(c_out, c_in) <= small_k_max:
                # Tiny contraction or tiny output: K broadcast-FMAs on the VPU
                # over lane-dense (C_out, HW) tiles; avoids an MXU matmul that
                # would use only a few rows and pay the result-FIFO latency.
                y = bias.astype(jnp.float32)      # (C_out, 1), broadcasts along lanes
                for k in range(c_in):             # static unroll (trace time)
                    y = y + w[:, k:k + 1].astype(jnp.float32) * h[k:k + 1, :]
                h = y
            else:
                # MXU path, f32 accumulation; output (C_out, HW) is lane-dense.
                h = jnp.dot(w.astype(jnp.float32), h,
                            preferred_element_type=jnp.float32) + bias
            if i < num_layers - 1:
                h = jnp.maximum(h, 0.0)           # ReLU on hidden layers only
        o_ref[b] = h.astype(o_ref.dtype)

    if nb == 1:
        compute_one(0)
    else:
        # fori_loop (NOT a static Python for): keeps only one image's
        # activations live -> bounded vreg pressure regardless of nb.
        def body(b, carry):
            compute_one(b)
            return carry

        lax.fori_loop(0, nb, body, 0)


def _choose_batch_block(n, c_in, c_out, hw_pad, target_bytes=4 << 20):
    """Pick NB so the per-step in+out working set is ~a few MiB, but keep
    >= 2 grid steps (so v7x's two TensorCores both get work) when N >= 2."""
    per_img = (c_in + c_out) * hw_pad * 4        # f32 bytes per image (in + out)
    nb = max(1, target_bytes // per_img)
    if n >= 2:
        nb = min(nb, pl.cdiv(n, 2))
    return int(min(nb, n))


def mlp_forward(x_nchw, weights, biases):
    """Forward pass matching PyTorch MLP (1x1 convs == per-pixel linears).

    weights[i]: (C_out_i, C_in_i)   (Conv2d weight with the 1x1 dims squeezed)
    biases[i] : (C_out_i,)
    """
    N, C, H, W = x_nchw.shape
    HW = H * W
    num_layers = len(weights)
    C_out = weights[-1].shape[0]

    # NCHW -> (N, C, H*W): pure reshape, no transpose.
    x = x_nchw.reshape(N, C, HW)

    # Keep the lane axis a multiple of 128 -> unmasked lane-dense stores.
    HW_pad = max(128, ((HW + 127) // 128) * 128)

    nb = _choose_batch_block(N, C, C_out, HW_pad)
    n_steps = pl.cdiv(N, nb)
    N_pad = n_steps * nb

    if (N_pad, HW_pad) != (N, HW):
        x = jnp.pad(x, ((0, N_pad - N), (0, 0), (0, HW_pad - HW)))

    params = []
    in_specs = [pl.BlockSpec((nb, C, HW_pad), lambda n: (n, 0, 0))]
    for w, b in zip(weights, biases):
        params.append(w)
        params.append(b.reshape(b.shape[0], 1))   # (C_out, 1) column bias
        # Full-array, VMEM-resident refs (no blocking, no per-step index_map).
        in_specs.append(pl.BlockSpec(memory_space=pltpu.MemorySpace.VMEM))
        in_specs.append(pl.BlockSpec(memory_space=pltpu.MemorySpace.VMEM))

    kernel = functools.partial(_fused_mlp_kernel, num_layers=num_layers, nb=nb)

    # Advisory cost estimate for XLA's scheduler around the custom call.
    flops = 2 * N * HW * sum(int(w.shape[0]) * int(w.shape[1]) for w in weights)
    bytes_accessed = (
        int(x.size) * x.dtype.itemsize
        + N_pad * C_out * HW_pad * x.dtype.itemsize
        + sum(int(p.size) * p.dtype.itemsize for p in params)
    )

    out = pl.pallas_call(
        kernel,
        out_shape=jax.ShapeDtypeStruct((N_pad, C_out, HW_pad), x_nchw.dtype),
        grid_spec=pltpu.PrefetchScalarGridSpec(
            num_scalar_prefetch=0,
            grid=(n_steps,),                      # batch-blocked grid
            in_specs=in_specs,
            out_specs=pl.BlockSpec((nb, C_out, HW_pad), lambda n: (n, 0, 0)),
        ),
        compiler_params=pltpu.CompilerParams(
            dimension_semantics=("parallel",),    # shards steps across TCs (v7x)
            vmem_limit_bytes=32 * 1024 * 1024,    # safe on v5e/v6e/v7x
        ),
        cost_estimate=pl.CostEstimate(
            flops=flops, transcendentals=0, bytes_accessed=bytes_accessed),
    )(x, *params)

    # Slice off batch / lane padding, then back to NCHW (free reshape).
    out = out[:N, :, :HW]
    return out.reshape(N, C_out, H, W)


def init_mlp_params(key, input_dim, hidden_dim, output_dim, num_layers,
                    dtype=jnp.float32):
    """Deterministic synthetic params in PyTorch Conv2d layout:
    weight (out_ch, in_ch) [1x1 dims squeezed], bias (out_ch,)."""
    h = [hidden_dim] * (num_layers - 1)
    dims_in = [input_dim] + h
    dims_out = h + [output_dim]
    weights, biases = [], []
    for n_in, n_out in zip(dims_in, dims_out):
        key, wk, bk = jax.random.split(key, 3)
        scale = 1.0 / jnp.sqrt(jnp.asarray(n_in, dtype))
        weights.append(jax.random.uniform(wk, (n_out, n_in), dtype, -scale, scale))
        biases.append(jax.random.uniform(bk, (n_out,), dtype, -scale, scale))
    return weights, biases


def mlp_forward_ref(x_nchw, weights, biases):
    """Pure-JAX reference for validation."""
    N, C, H, W = x_nchw.shape
    x = x_nchw.reshape(N, C, H * W)
    num_layers = len(weights)
    for i, (w, b) in enumerate(zip(weights, biases)):
        x = jnp.einsum("oi,nim->nom", w, x) + b[None, :, None]
        if i < num_layers - 1:
            x = jnp.maximum(x, 0.0)
    return x.reshape(N, -1, H, W)


if __name__ == "__main__":
    key = jax.random.PRNGKey(0)
    kx, kp, kx2 = jax.random.split(key, 3)

    # MLP(input_dim=4, hidden_dim=32, output_dim=4, num_layers=3) on NCHW.
    input_dim, hidden_dim, output_dim, num_layers = 4, 32, 4, 3
    weights, biases = init_mlp_params(kp, input_dim, hidden_dim, output_dim,
                                      num_layers)

    # Check 1: primary small shape (nb=1, 2 grid steps, HW=256 lane-dense).
    x = jax.random.normal(kx, (2, input_dim, 16, 16), jnp.float32)
    out = jax.block_until_ready(mlp_forward(x, weights, biases))
    ref = mlp_forward_ref(x, weights, biases)
    assert out.shape == (2, output_dim, 16, 16)
    assert jnp.allclose(out, ref, atol=1e-5, rtol=1e-5)

    # Check 2: exercises the batched-block fori_loop path (nb>1) and the
    # HW-padding path (H*W=100 -> padded to 128 lanes, pad sliced off).
    x2 = jax.random.normal(kx2, (8, input_dim, 10, 10), jnp.float32)
    out2 = jax.block_until_ready(mlp_forward(x2, weights, biases))
    ref2 = mlp_forward_ref(x2, weights, biases)
    assert out2.shape == (8, output_dim, 10, 10)
    assert jnp.allclose(out2, ref2, atol=1e-5, rtol=1e-5)

    print("KERNEL_OK")
</pallas_src>

<mosaic_0001>
module attributes {stable_mosaic.version = 11 : i64} {
  func.func @_fused_mlp_kernel(%arg0: i32, %arg1: memref<1x4x256xf32, #tpu.memory_space<vmem>>, %arg2: memref<32x4xf32, #tpu.memory_space<vmem>>, %arg3: memref<32x1xf32, #tpu.memory_space<vmem>>, %arg4: memref<32x32xf32, #tpu.memory_space<vmem>>, %arg5: memref<32x1xf32, #tpu.memory_space<vmem>>, %arg6: memref<4x32xf32, #tpu.memory_space<vmem>>, %arg7: memref<4x1xf32, #tpu.memory_space<vmem>>, %arg8: memref<1x4x256xf32, #tpu.memory_space<vmem>>) attributes {dimension_semantics = [#tpu.dimension_semantics<parallel>], iteration_bounds = array<i64: 2>, scalar_prefetch = 0 : i64, scratch_operands = 0 : i64, tpu.core_type = #tpu.core_type<tc>, window_params = [{transform_indices = @transform_0, window_bounds = array<i64: 1, 4, 256>}, {pipeline_mode = #tpu.pipeline_mode<synchronous>, transform_indices = @transform_1, window_bounds = array<i64: 32, 4>}, {pipeline_mode = #tpu.pipeline_mode<synchronous>, transform_indices = @transform_2, window_bounds = array<i64: 32, 1>}, {pipeline_mode = #tpu.pipeline_mode<synchronous>, transform_indices = @transform_3, window_bounds = array<i64: 32, 32>}, {pipeline_mode = #tpu.pipeline_mode<synchronous>, transform_indices = @transform_4, window_bounds = array<i64: 32, 1>}, {pipeline_mode = #tpu.pipeline_mode<synchronous>, transform_indices = @transform_5, window_bounds = array<i64: 4, 32>}, {pipeline_mode = #tpu.pipeline_mode<synchronous>, transform_indices = @transform_6, window_bounds = array<i64: 4, 1>}, {transform_indices = @transform_7, window_bounds = array<i64: 1, 4, 256>}]} {
    %c0 = arith.constant 0 : index
    %c0_0 = arith.constant 0 : index
    %c0_1 = arith.constant 0 : index
    %0 = vector.load %arg1[%c0, %c0_0, %c0_1] : memref<1x4x256xf32, #tpu.memory_space<vmem>>, vector<1x4x256xf32>
    %1 = vector.shape_cast %0 : vector<1x4x256xf32> to vector<4x256xf32>
    %c0_2 = arith.constant 0 : index
    %c0_3 = arith.constant 0 : index
    %2 = vector.load %arg2[%c0_2, %c0_3] : memref<32x4xf32, #tpu.memory_space<vmem>>, vector<32x4xf32>
    %c0_4 = arith.constant 0 : index
    %c0_5 = arith.constant 0 : index
    %3 = vector.load %arg3[%c0_4, %c0_5] : memref<32x1xf32, #tpu.memory_space<vmem>>, vector<32x1xf32>
    %4 = vector.extract_strided_slice %2 {offsets = [0, 0], sizes = [32, 1], strides = [1, 1]} : vector<32x4xf32> to vector<32x1xf32>
    %5 = vector.extract_strided_slice %1 {offsets = [0, 0], sizes = [1, 256], strides = [1, 1]} : vector<4x256xf32> to vector<1x256xf32>
    %6 = vector.broadcast %4 : vector<32x1xf32> to vector<32x256xf32>
    %7 = vector.broadcast %5 : vector<1x256xf32> to vector<32x256xf32>
    %8 = arith.mulf %6, %7 : vector<32x256xf32>
    %9 = vector.broadcast %3 : vector<32x1xf32> to vector<32x256xf32>
    %10 = arith.addf %9, %8 : vector<32x256xf32>
    %11 = vector.extract_strided_slice %2 {offsets = [0, 1], sizes = [32, 1], strides = [1, 1]} : vector<32x4xf32> to vector<32x1xf32>
    %12 = vector.extract_strided_slice %1 {offsets = [1, 0], sizes = [1, 256], strides = [1, 1]} : vector<4x256xf32> to vector<1x256xf32>
    %13 = vector.broadcast %11 : vector<32x1xf32> to vector<32x256xf32>
    %14 = vector.broadcast %12 : vector<1x256xf32> to vector<32x256xf32>
    %15 = arith.mulf %13, %14 : vector<32x256xf32>
    %16 = arith.addf %10, %15 : vector<32x256xf32>
    %17 = vector.extract_strided_slice %2 {offsets = [0, 2], sizes = [32, 1], strides = [1, 1]} : vector<32x4xf32> to vector<32x1xf32>
    %18 = vector.extract_strided_slice %1 {offsets = [2, 0], sizes = [1, 256], strides = [1, 1]} : vector<4x256xf32> to vector<1x256xf32>
    %19 = vector.broadcast %17 : vector<32x1xf32> to vector<32x256xf32>
    %20 = vector.broadcast %18 : vector<1x256xf32> to vector<32x256xf32>
    %21 = arith.mulf %19, %20 : vector<32x256xf32>
    %22 = arith.addf %16, %21 : vector<32x256xf32>
    %23 = vector.extract_strided_slice %2 {offsets = [0, 3], sizes = [32, 1], strides = [1, 1]} : vector<32x4xf32> to vector<32x1xf32>
    %24 = vector.extract_strided_slice %1 {offsets = [3, 0], sizes = [1, 256], strides = [1, 1]} : vector<4x256xf32> to vector<1x256xf32>
    %25 = vector.broadcast %23 : vector<32x1xf32> to vector<32x256xf32>
    %26 = vector.broadcast %24 : vector<1x256xf32> to vector<32x256xf32>
    %27 = arith.mulf %25, %26 : vector<32x256xf32>
    %28 = arith.addf %22, %27 : vector<32x256xf32>
    %cst = arith.constant 0.000000e+00 : f32
    %29 = vector.broadcast %cst : f32 to vector<32x256xf32>
    %30 = arith.maximumf %28, %29 : vector<32x256xf32>
    %c0_6 = arith.constant 0 : index
    %c0_7 = arith.constant 0 : index
    %31 = vector.load %arg4[%c0_6, %c0_7] : memref<32x32xf32, #tpu.memory_space<vmem>>, vector<32x32xf32>
    %c0_8 = arith.constant 0 : index
    %c0_9 = arith.constant 0 : index
    %32 = vector.load %arg5[%c0_8, %c0_9] : memref<32x1xf32, #tpu.memory_space<vmem>>, vector<32x1xf32>
    %cst_10 = arith.constant dense<0.000000e+00> : vector<32x256xf32>
    %33 = tpu.matmul %31, %30, %cst_10 {dimension_numbers = #tpu.dot_dimension_numbers<[1], [0], [0], [1], [0, 0, 1, 1], [], []>} : vector<32x32xf32>, vector<32x256xf32>, vector<32x256xf32> -> vector<32x256xf32>
    %34 = vector.broadcast %32 : vector<32x1xf32> to vector<32x256xf32>
    %35 = arith.addf %33, %34 : vector<32x256xf32>
    %cst_11 = arith.constant 0.000000e+00 : f32
    %36 = vector.broadcast %cst_11 : f32 to vector<32x256xf32>
    %37 = arith.maximumf %35, %36 : vector<32x256xf32>
    %c0_12 = arith.constant 0 : index
    %c0_13 = arith.constant 0 : index
    %38 = vector.load %arg6[%c0_12, %c0_13] : memref<4x32xf32, #tpu.memory_space<vmem>>, vector<4x32xf32>
    %c0_14 = arith.constant 0 : index
    %c0_15 = arith.constant 0 : index
    %39 = vector.load %arg7[%c0_14, %c0_15] : memref<4x1xf32, #tpu.memory_space<vmem>>, vector<4x1xf32>
    %40 = vector.extract_strided_slice %38 {offsets = [0, 0], sizes = [4, 1], strides = [1, 1]} : vector<4x32xf32> to vector<4x1xf32>
    %41 = vector.extract_strided_slice %37 {offsets = [0, 0], sizes = [1, 256], strides = [1, 1]} : vector<32x256xf32> to vector<1x256xf32>
    %42 = vector.broadcast %40 : vector<4x1xf32> to vector<4x256xf32>
    %43 = vector.broadcast %41 : vector<1x256xf32> to vector<4x256xf32>
    %44 = arith.mulf %42, %43 : vector<4x256xf32>
    %45 = vector.broadcast %39 : vector<4x1xf32> to vector<4x256xf32>
    %46 = arith.addf %45, %44 : vector<4x256xf32>
    %47 = vector.extract_strided_slice %38 {offsets = [0, 1], sizes = [4, 1], strides = [1, 1]} : vector<4x32xf32> to vector<4x1xf32>
    %48 = vector.extract_strided_slice %37 {offsets = [1, 0], sizes = [1, 256], strides = [1, 1]} : vector<32x256xf32> to vector<1x256xf32>
    %49 = vector.broadcast %47 : vector<4x1xf32> to vector<4x256xf32>
    %50 = vector.broadcast %48 : vector<1x256xf32> to vector<4x256xf32>
    %51 = arith.mulf %49, %50 : vector<4x256xf32>
    %52 = arith.addf %46, %51 : vector<4x256xf32>
    %53 = vector.extract_strided_slice %38 {offsets = [0, 2], sizes = [4, 1], strides = [1, 1]} : vector<4x32xf32> to vector<4x1xf32>
    %54 = vector.extract_strided_slice %37 {offsets = [2, 0], sizes = [1, 256], strides = [1, 1]} : vector<32x256xf32> to vector<1x256xf32>
    %55 = vector.broadcast %53 : vector<4x1xf32> to vector<4x256xf32>
    %56 = vector.broadcast %54 : vector<1x256xf32> to vector<4x256xf32>
    %57 = arith.mulf %55, %56 : vector<4x256xf32>
    %58 = arith.addf %52, %57 : vector<4x256xf32>
    %59 = vector.extract_strided_slice %38 {offsets = [0, 3], sizes = [4, 1], strides = [1, 1]} : vector<4x32xf32> to vector<4x1xf32>
    %60 = vector.extract_strided_slice %37 {offsets = [3, 0], sizes = [1, 256], strides = [1, 1]} : vector<32x256xf32> to vector<1x256xf32>
    %61 = vector.broadcast %59 : vector<4x1xf32> to vector<4x256xf32>
    %62 = vector.broadcast %60 : vector<1x256xf32> to vector<4x256xf32>
    %63 = arith.mulf %61, %62 : vector<4x256xf32>
    %64 = arith.addf %58, %63 : vector<4x256xf32>
    %65 = vector.extract_strided_slice %38 {offsets = [0, 4], sizes = [4, 1], strides = [1, 1]} : vector<4x32xf32> to vector<4x1xf32>
    %66 = vector.extract_strided_slice %37 {offsets = [4, 0], sizes = [1, 256], strides = [1, 1]} : vector<32x256xf32> to vector<1x256xf32>
    %67 = vector.broadcast %65 : vector<4x1xf32> to vector<4x256xf32>
    %68 = vector.broadcast %66 : vector<1x256xf32> to vector<4x256xf32>
    %69 = arith.mulf %67, %68 : vector<4x256xf32>
    %70 = arith.addf %64, %69 : vector<4x256xf32>
    %71 = vector.extract_strided_slice %38 {offsets = [0, 5], sizes = [4, 1], strides = [1, 1]} : vector<4x32xf32> to vector<4x1xf32>
    %72 = vector.extract_strided_slice %37 {offsets = [5, 0], sizes = [1, 256], strides = [1, 1]} : vector<32x256xf32> to vector<1x256xf32>
    %73 = vector.broadcast %71 : vector<4x1xf32> to vector<4x256xf32>
    %74 = vector.broadcast %72 : vector<1x256xf32> to vector<4x256xf32>
    %75 = arith.mulf %73, %74 : vector<4x256xf32>
    %76 = arith.addf %70, %75 : vector<4x256xf32>
    %77 = vector.extract_strided_slice %38 {offsets = [0, 6], sizes = [4, 1], strides = [1, 1]} : vector<4x32xf32> to vector<4x1xf32>
    %78 = vector.extract_strided_slice %37 {offsets = [6, 0], sizes = [1, 256], strides = [1, 1]} : vector<32x256xf32> to vector<1x256xf32>
    %79 = vector.broadcast %77 : vector<4x1xf32> to vector<4x256xf32>
    %80 = vector.broadcast %78 : vector<1x256xf32> to vector<4x256xf32>
    %81 = arith.mulf %79, %80 : vector<4x256xf32>
    %82 = arith.addf %76, %81 : vector<4x256xf32>
    %83 = vector.extract_strided_slice %38 {offsets = [0, 7], sizes = [4, 1], strides = [1, 1]} : vector<4x32xf32> to vector<4x1xf32>
    %84 = vector.extract_strided_slice %37 {offsets = [7, 0], sizes = [1, 256], strides = [1, 1]} : vector<32x256xf32> to vector<1x256xf32>
    %85 = vector.broadcast %83 : vector<4x1xf32> to vector<4x256xf32>
    %86 = vector.broadcast %84 : vector<1x256xf32> to vector<4x256xf32>
    %87 = arith.mulf %85, %86 : vector<4x256xf32>
    %88 = arith.addf %82, %87 : vector<4x256xf32>
    %89 = vector.extract_strided_slice %38 {offsets = [0, 8], sizes = [4, 1], strides = [1, 1]} : vector<4x32xf32> to vector<4x1xf32>
    %90 = vector.extract_strided_slice %37 {offsets = [8, 0], sizes = [1, 256], strides = [1, 1]} : vector<32x256xf32> to vector<1x256xf32>
    %91 = vector.broadcast %89 : vector<4x1xf32> to vector<4x256xf32>
    %92 = vector.broadcast %90 : vector<1x256xf32> to vector<4x256xf32>
    %93 = arith.mulf %91, %92 : vector<4x256xf32>
    %94 = arith.addf %88, %93 : vector<4x256xf32>
    %95 = vector.extract_strided_slice %38 {offsets = [0, 9], sizes = [4, 1], strides = [1, 1]} : vector<4x32xf32> to vector<4x1xf32>
    %96 = vector.extract_strided_slice %37 {offsets = [9, 0], sizes = [1, 256], strides = [1, 1]} : vector<32x256xf32> to vector<1x256xf32>
    %97 = vector.broadcast %95 : vector<4x1xf32> to vector<4x256xf32>
    %98 = vector.broadcast %96 : vector<1x256xf32> to vector<4x256xf32>
    %99 = arith.mulf %97, %98 : vector<4x256xf32>
    %100 = arith.addf %94, %99 : vector<4x256xf32>
    %101 = vector.extract_strided_slice %38 {offsets = [0, 10], sizes = [4, 1], strides = [1, 1]} : vector<4x32xf32> to vector<4x1xf32>
    %102 = vector.extract_strided_slice %37 {offsets = [10, 0], sizes = [1, 256], strides = [1, 1]} : vector<32x256xf32> to vector<1x256xf32>
    %103 = vector.broadcast %101 : vector<4x1xf32> to vector<4x256xf32>
    %104 = vector.broadcast %102 : vector<1x256xf32> to vector<4x256xf32>
    %105 = arith.mulf %103, %104 : vector<4x256xf32>
    %106 = arith.addf %100, %105 : vector<4x256xf32>
    %107 = vector.extract_strided_slice %38 {offsets = [0, 11], sizes = [4, 1], strides = [1, 1]} : vector<4x32xf32> to vector<4x1xf32>
    %108 = vector.extract_strided_slice %37 {offsets = [11, 0], sizes = [1, 256], strides = [1, 1]} : vector<32x256xf32> to vector<1x256xf32>
    %109 = vector.broadcast %107 : vector<4x1xf32> to vector<4x256xf32>
    %110 = vector.broadcast %108 : vector<1x256xf32> to vector<4x256xf32>
    %111 = arith.mulf %109, %110 : vector<4x256xf32>
    %112 = arith.addf %106, %111 : vector<4x256xf32>
    %113 = vector.extract_strided_slice %38 {offsets = [0, 12], sizes = [4, 1], strides = [1, 1]} : vector<4x32xf32> to vector<4x1xf32>
    %114 = vector.extract_strided_slice %37 {offsets = [12, 0], sizes = [1, 256], strides = [1, 1]} : vector<32x256xf32> to vector<1x256xf32>
    %115 = vector.broadcast %113 : vector<4x1xf32> to vector<4x256xf32>
    %116 = vector.broadcast %114 : vector<1x256xf32> to vector<4x256xf32>
    %117 = arith.mulf %115, %116 : vector<4x256xf32>
    %118 = arith.addf %112, %117 : vector<4x256xf32>
    %119 = vector.extract_strided_slice %38 {offsets = [0, 13], sizes = [4, 1], strides = [1, 1]} : vector<4x32xf32> to vector<4x1xf32>
    %120 = vector.extract_strided_slice %37 {offsets = [13, 0], sizes = [1, 256], strides = [1, 1]} : vector<32x256xf32> to vector<1x256xf32>
    %121 = vector.broadcast %119 : vector<4x1xf32> to vector<4x256xf32>
    %122 = vector.broadcast %120 : vector<1x256xf32> to vector<4x256xf32>
    %123 = arith.mulf %121, %122 : vector<4x256xf32>
    %124 = arith.addf %118, %123 : vector<4x256xf32>
    %125 = vector.extract_strided_slice %38 {offsets = [0, 14], sizes = [4, 1], strides = [1, 1]} : vector<4x32xf32> to vector<4x1xf32>
    %126 = vector.extract_strided_slice %37 {offsets = [14, 0], sizes = [1, 256], strides = [1, 1]} : vector<32x256xf32> to vector<1x256xf32>
    %127 = vector.broadcast %125 : vector<4x1xf32> to vector<4x256xf32>
    %128 = vector.broadcast %126 : vector<1x256xf32> to vector<4x256xf32>
    %129 = arith.mulf %127, %128 : vector<4x256xf32>
    %130 = arith.addf %124, %129 : vector<4x256xf32>
    %131 = vector.extract_strided_slice %38 {offsets = [0, 15], sizes = [4, 1], strides = [1, 1]} : vector<4x32xf32> to vector<4x1xf32>
    %132 = vector.extract_strided_slice %37 {offsets = [15, 0], sizes = [1, 256], strides = [1, 1]} : vector<32x256xf32> to vector<1x256xf32>
    %133 = vector.broadcast %131 : vector<4x1xf32> to vector<4x256xf32>
    %134 = vector.broadcast %132 : vector<1x256xf32> to vector<4x256xf32>
    %135 = arith.mulf %133, %134 : vector<4x256xf32>
    %136 = arith.addf %130, %135 : vector<4x256xf32>
    %137 = vector.extract_strided_slice %38 {offsets = [0, 16], sizes = [4, 1], strides = [1, 1]} : vector<4x32xf32> to vector<4x1xf32>
    %138 = vector.extract_strided_slice %37 {offsets = [16, 0], sizes = [1, 256], strides = [1, 1]} : vector<32x256xf32> to vector<1x256xf32>
    %139 = vector.broadcast %137 : vector<4x1xf32> to vector<4x256xf32>
    %140 = vector.broadcast %138 : vector<1x256xf32> to vector<4x256xf32>
    %141 = arith.mulf %139, %140 : vector<4x256xf32>
    %142 = arith.addf %136, %141 : vector<4x256xf32>
    %143 = vector.extract_strided_slice %38 {offsets = [0, 17], sizes = [4, 1], strides = [1, 1]} : vector<4x32xf32> to vector<4x1xf32>
    %144 = vector.extract_strided_slice %37 {offsets = [17, 0], sizes = [1, 256], strides = [1, 1]} : vector<32x256xf32> to vector<1x256xf32>
    %145 = vector.broadcast %143 : vector<4x1xf32> to vector<4x256xf32>
    %146 = vector.broadcast %144 : vector<1x256xf32> to vector<4x256xf32>
    %147 = arith.mulf %145, %146 : vector<4x256xf32>
    %148 = arith.addf %142, %147 : vector<4x256xf32>
    %149 = vector.extract_strided_slice %38 {offsets = [0, 18], sizes = [4, 1], strides = [1, 1]} : vector<4x32xf32> to vector<4x1xf32>
    %150 = vector.extract_strided_slice %37 {offsets = [18, 0], sizes = [1, 256], strides = [1, 1]} : vector<32x256xf32> to vector<1x256xf32>
    %151 = vector.broadcast %149 : vector<4x1xf32> to vector<4x256xf32>
    %152 = vector.broadcast %150 : vector<1x256xf32> to vector<4x256xf32>
    %153 = arith.mulf %151, %152 : vector<4x256xf32>
    %154 = arith.addf %148, %153 : vector<4x256xf32>
    %155 = vector.extract_strided_slice %38 {offsets = [0, 19], sizes = [4, 1], strides = [1, 1]} : vector<4x32xf32> to vector<4x1xf32>
    %156 = vector.extract_strided_slice %37 {offsets = [19, 0], sizes = [1, 256], strides = [1, 1]} : vector<32x256xf32> to vector<1x256xf32>
    %157 = vector.broadcast %155 : vector<4x1xf32> to vector<4x256xf32>
    %158 = vector.broadcast %156 : vector<1x256xf32> to vector<4x256xf32>
    %159 = arith.mulf %157, %158 : vector<4x256xf32>
    %160 = arith.addf %154, %159 : vector<4x256xf32>
    %161 = vector.extract_strided_slice %38 {offsets = [0, 20], sizes = [4, 1], strides = [1, 1]} : vector<4x32xf32> to vector<4x1xf32>
    %162 = vector.extract_strided_slice %37 {offsets = [20, 0], sizes = [1, 256], strides = [1, 1]} : vector<32x256xf32> to vector<1x256xf32>
    %163 = vector.broadcast %161 : vector<4x1xf32> to vector<4x256xf32>
    %164 = vector.broadcast %162 : vector<1x256xf32> to vector<4x256xf32>
    %165 = arith.mulf %163, %164 : vector<4x256xf32>
    %166 = arith.addf %160, %165 : vector<4x256xf32>
    %167 = vector.extract_strided_slice %38 {offsets = [0, 21], sizes = [4, 1], strides = [1, 1]} : vector<4x32xf32> to vector<4x1xf32>
    %168 = vector.extract_strided_slice %37 {offsets = [21, 0], sizes = [1, 256], strides = [1, 1]} : vector<32x256xf32> to vector<1x256xf32>
    %169 = vector.broadcast %167 : vector<4x1xf32> to vector<4x256xf32>
    %170 = vector.broadcast %168 : vector<1x256xf32> to vector<4x256xf32>
    %171 = arith.mulf %169, %170 : vector<4x256xf32>
    %172 = arith.addf %166, %171 : vector<4x256xf32>
    %173 = vector.extract_strided_slice %38 {offsets = [0, 22], sizes = [4, 1], strides = [1, 1]} : vector<4x32xf32> to vector<4x1xf32>
    %174 = vector.extract_strided_slice %37 {offsets = [22, 0], sizes = [1, 256], strides = [1, 1]} : vector<32x256xf32> to vector<1x256xf32>
    %175 = vector.broadcast %173 : vector<4x1xf32> to vector<4x256xf32>
    %176 = vector.broadcast %174 : vector<1x256xf32> to vector<4x256xf32>
    %177 = arith.mulf %175, %176 : vector<4x256xf32>
    %178 = arith.addf %172, %177 : vector<4x256xf32>
    %179 = vector.extract_strided_slice %38 {offsets = [0, 23], sizes = [4, 1], strides = [1, 1]} : vector<4x32xf32> to vector<4x1xf32>
    %180 = vector.extract_strided_slice %37 {offsets = [23, 0], sizes = [1, 256], strides = [1, 1]} : vector<32x256xf32> to vector<1x256xf32>
    %181 = vector.broadcast %179 : vector<4x1xf32> to vector<4x256xf32>
    %182 = vector.broadcast %180 : vector<1x256xf32> to vector<4x256xf32>
    %183 = arith.mulf %181, %182 : vector<4x256xf32>
    %184 = arith.addf %178, %183 : vector<4x256xf32>
    %185 = vector.extract_strided_slice %38 {offsets = [0, 24], sizes = [4, 1], strides = [1, 1]} : vector<4x32xf32> to vector<4x1xf32>
    %186 = vector.extract_strided_slice %37 {offsets = [24, 0], sizes = [1, 256], strides = [1, 1]} : vector<32x256xf32> to vector<1x256xf32>
    %187 = vector.broadcast %185 : vector<4x1xf32> to vector<4x256xf32>
    %188 = vector.broadcast %186 : vector<1x256xf32> to vector<4x256xf32>
    %189 = arith.mulf %187, %188 : vector<4x256xf32>
    %190 = arith.addf %184, %189 : vector<4x256xf32>
    %191 = vector.extract_strided_slice %38 {offsets = [0, 25], sizes = [4, 1], strides = [1, 1]} : vector<4x32xf32> to vector<4x1xf32>
    %192 = vector.extract_strided_slice %37 {offsets = [25, 0], sizes = [1, 256], strides = [1, 1]} : vector<32x256xf32> to vector<1x256xf32>
    %193 = vector.broadcast %191 : vector<4x1xf32> to vector<4x256xf32>
    %194 = vector.broadcast %192 : vector<1x256xf32> to vector<4x256xf32>
    %195 = arith.mulf %193, %194 : vector<4x256xf32>
    %196 = arith.addf %190, %195 : vector<4x256xf32>
    %197 = vector.extract_strided_slice %38 {offsets = [0, 26], sizes = [4, 1], strides = [1, 1]} : vector<4x32xf32> to vector<4x1xf32>
    %198 = vector.extract_strided_slice %37 {offsets = [26, 0], sizes = [1, 256], strides = [1, 1]} : vector<32x256xf32> to vector<1x256xf32>
    %199 = vector.broadcast %197 : vector<4x1xf32> to vector<4x256xf32>
    %200 = vector.broadcast %198 : vector<1x256xf32> to vector<4x256xf32>
    %201 = arith.mulf %199, %200 : vector<4x256xf32>
    %202 = arith.addf %196, %201 : vector<4x256xf32>
    %203 = vector.extract_strided_slice %38 {offsets = [0, 27], sizes = [4, 1], strides = [1, 1]} : vector<4x32xf32> to vector<4x1xf32>
    %204 = vector.extract_strided_slice %37 {offsets = [27, 0], sizes = [1, 256], strides = [1, 1]} : vector<32x256xf32> to vector<1x256xf32>
    %205 = vector.broadcast %203 : vector<4x1xf32> to vector<4x256xf32>
    %206 = vector.broadcast %204 : vector<1x256xf32> to vector<4x256xf32>
    %207 = arith.mulf %205, %206 : vector<4x256xf32>
    %208 = arith.addf %202, %207 : vector<4x256xf32>
    %209 = vector.extract_strided_slice %38 {offsets = [0, 28], sizes = [4, 1], strides = [1, 1]} : vector<4x32xf32> to vector<4x1xf32>
    %210 = vector.extract_strided_slice %37 {offsets = [28, 0], sizes = [1, 256], strides = [1, 1]} : vector<32x256xf32> to vector<1x256xf32>
    %211 = vector.broadcast %209 : vector<4x1xf32> to vector<4x256xf32>
    %212 = vector.broadcast %210 : vector<1x256xf32> to vector<4x256xf32>
    %213 = arith.mulf %211, %212 : vector<4x256xf32>
    %214 = arith.addf %208, %213 : vector<4x256xf32>
    %215 = vector.extract_strided_slice %38 {offsets = [0, 29], sizes = [4, 1], strides = [1, 1]} : vector<4x32xf32> to vector<4x1xf32>
    %216 = vector.extract_strided_slice %37 {offsets = [29, 0], sizes = [1, 256], strides = [1, 1]} : vector<32x256xf32> to vector<1x256xf32>
    %217 = vector.broadcast %215 : vector<4x1xf32> to vector<4x256xf32>
    %218 = vector.broadcast %216 : vector<1x256xf32> to vector<4x256xf32>
    %219 = arith.mulf %217, %218 : vector<4x256xf32>
    %220 = arith.addf %214, %219 : vector<4x256xf32>
    %221 = vector.extract_strided_slice %38 {offsets = [0, 30], sizes = [4, 1], strides = [1, 1]} : vector<4x32xf32> to vector<4x1xf32>
    %222 = vector.extract_strided_slice %37 {offsets = [30, 0], sizes = [1, 256], strides = [1, 1]} : vector<32x256xf32> to vector<1x256xf32>
    %223 = vector.broadcast %221 : vector<4x1xf32> to vector<4x256xf32>
    %224 = vector.broadcast %222 : vector<1x256xf32> to vector<4x256xf32>
    %225 = arith.mulf %223, %224 : vector<4x256xf32>
    %226 = arith.addf %220, %225 : vector<4x256xf32>
    %227 = vector.extract_strided_slice %38 {offsets = [0, 31], sizes = [4, 1], strides = [1, 1]} : vector<4x32xf32> to vector<4x1xf32>
    %228 = vector.extract_strided_slice %37 {offsets = [31, 0], sizes = [1, 256], strides = [1, 1]} : vector<32x256xf32> to vector<1x256xf32>
    %229 = vector.broadcast %227 : vector<4x1xf32> to vector<4x256xf32>
    %230 = vector.broadcast %228 : vector<1x256xf32> to vector<4x256xf32>
    %231 = arith.mulf %229, %230 : vector<4x256xf32>
    %232 = arith.addf %226, %231 : vector<4x256xf32>
    %c0_16 = arith.constant 0 : index
    %c0_17 = arith.constant 0 : index
    %c0_18 = arith.constant 0 : index
    %233 = vector.load %arg8[%c0_16, %c0_17, %c0_18] : memref<1x4x256xf32, #tpu.memory_space<vmem>>, vector<1x4x256xf32>
    %234 = vector.shape_cast %233 : vector<1x4x256xf32> to vector<4x256xf32>
    %235 = vector.shape_cast %232 : vector<4x256xf32> to vector<1x4x256xf32>
    tpu.vector_store %arg8[%c0_16, %c0_17, %c0_18], %235 {strides = array<i32>} : memref<1x4x256xf32, #tpu.memory_space<vmem>>, vector<1x4x256xf32>,
    return
  }
  func.func @transform_0(%arg0: i32) -> (i32, i32, i32) {
    %c0_i32 = arith.constant 0 : i32
    %c0_i32_0 = arith.constant 0 : i32
    %c0_i32_1 = arith.constant 0 : i32
    return %arg0, %c0_i32, %c0_i32_0 : i32, i32, i32
  }
  func.func @transform_1(%arg0: i32) -> (i32, i32) {
    %c0_i32 = arith.constant 0 : i32
    %c0_i32_0 = arith.constant 0 : i32
    %c0_i32_1 = arith.constant 0 : i32
    return %c0_i32, %c0_i32_0 : i32, i32
  }
  func.func @transform_2(%arg0: i32) -> (i32, i32) {
    %c0_i32 = arith.constant 0 : i32
    %c0_i32_0 = arith.constant 0 : i32
    %c0_i32_1 = arith.constant 0 : i32
    return %c0_i32, %c0_i32_0 : i32, i32
  }
  func.func @transform_3(%arg0: i32) -> (i32, i32) {
    %c0_i32 = arith.constant 0 : i32
    %c0_i32_0 = arith.constant 0 : i32
    %c0_i32_1 = arith.constant 0 : i32
    return %c0_i32, %c0_i32_0 : i32, i32
  }
  func.func @transform_4(%arg0: i32) -> (i32, i32) {
    %c0_i32 = arith.constant 0 : i32
    %c0_i32_0 = arith.constant 0 : i32
    %c0_i32_1 = arith.constant 0 : i32
    return %c0_i32, %c0_i32_0 : i32, i32
  }
  func.func @transform_5(%arg0: i32) -> (i32, i32) {
    %c0_i32 = arith.constant 0 : i32
    %c0_i32_0 = arith.constant 0 : i32
    %c0_i32_1 = arith.constant 0 : i32
    return %c0_i32, %c0_i32_0 : i32, i32
  }
  func.func @transform_6(%arg0: i32) -> (i32, i32) {
    %c0_i32 = arith.constant 0 : i32
    %c0_i32_0 = arith.constant 0 : i32
    %c0_i32_1 = arith.constant 0 : i32
    return %c0_i32, %c0_i32_0 : i32, i32
  }
  func.func @transform_7(%arg0: i32) -> (i32, i32, i32) {
    %c0_i32 = arith.constant 0 : i32
    %c0_i32_0 = arith.constant 0 : i32
    %c0_i32_1 = arith.constant 0 : i32
    return %arg0, %c0_i32, %c0_i32_0 : i32, i32, i32
  }
}

</mosaic_0001>

<llo_original>
// kernel: tpu_custom_call.1
$region0: #{tpu_custom_call.1}
  #allocation0 [shape = 'u32[]', space=smem, size = 0x4, offset = 0x4, fixed_abs, tag = 'smem constant byte address 0x4 - core index']
  #allocation1 [shape = 'u32[144,128]{1,0:T(1,128)}', space=vmem, size = 0x12000, scoped, tag = 'internal scratch']
  %s0 = inlined_call_operand.vmem [shape: f32[2,4,256], index: 0, kind: input, shape index: {}]
  %s1 = inlined_call_operand.vmem [shape: f32[32,4], index: 1, kind: input, shape index: {}]
  %s2 = inlined_call_operand.vmem [shape: f32[32,1], index: 2, kind: input, shape index: {}]
  %s3 = inlined_call_operand.vmem [shape: f32[32,32], index: 3, kind: input, shape index: {}]
  %s4 = inlined_call_operand.vmem [shape: f32[32,1], index: 4, kind: input, shape index: {}]
  %s5 = inlined_call_operand.vmem [shape: f32[4,32], index: 5, kind: input, shape index: {}]
  %s6 = inlined_call_operand.vmem [shape: f32[4,1], index: 6, kind: input, shape index: {}]
  %s7 = inlined_call_operand.hbm [shape: f32[2,4,256], index: 7, kind: output, shape index: {}]
  %s8 = sld [smem:[#allocation0]]
  $region61: #{tpu_custom_call.1} parent=0
    _
  %s10 = ssub.s32 1, %s8
  %s11 = scalar_select 0, %s10, %s8
  $region1: #{tpu_custom_call.1} parent=0
    #allocation2 [shape = 'u8[8192]{0}', space=vmem, size = 0x2000, scoped, tag = 'output window, operand 0']
    #allocation3 [shape = 's32[2]{0}', space=sflag, size = 0x8, scoped, tag = 'scoped memory for tpu_custom_call.1']
    %12 = vsyncpa [#allocation3], 0
    %s13 = scalar_lea.sflag [#allocation3], 1
    %14 = vsyncpa %s13, 0
    loop: start=0, step=1, limit=4
    $region2: #{tpu_custom_call.1} parent=1 // loop_pre_header
      _
    $region3: #{tpu_custom_call.1} parent=1 // loop_header
      %s16 = sphi 0, %s20
      %p17 = scmp.ge.s32.totalorder %s16, 4
      %s26 = sphi 0, %s28
      %s29 = sphi 0, %s26
      %s30 = sphi 0, %s29
      %s46 = sphi 0, %s30
      %s50 = sphi 0, %s50
      %s52 = sphi 0, %s50
      %s53 = sphi 0, %s52
      %s67 = sphi 0, %s53
      %s71 = sphi 0, %s71
      %s73 = sphi 0, %s71
      %s74 = sphi 0, %s73
      %s88 = sphi 0, %s74
      %s92 = sphi 0, %s92
      %s94 = sphi 0, %s92
      %s95 = sphi 0, %s94
      %s109 = sphi 0, %s95
      %s113 = sphi 0, %s113
      %s115 = sphi 0, %s113
      %s116 = sphi 0, %s115
      %s130 = sphi 0, %s116
      %s134 = sphi 0, %s134
      %s136 = sphi 0, %s134
      %s137 = sphi 0, %s136
      %s151 = sphi 0, %s137
      %s155 = sphi 0, %s155
      %s157 = sphi 0, %s155
      %s158 = sphi 0, %s157
      %s172 = sphi 0, %s158
      %s178 = sphi 0, %s180
      %s181 = sphi 0, %s178
      %s182 = sphi 0, %s181
      %s198 = sphi 0, %s182
    $region4: #{tpu_custom_call.1} parent=1 // loop_header_branch
      %19 = sbr.rel (%p17) target = $region8
    $region5: #{tpu_custom_call.1} parent=1 // loop_body
      %s21 = ssub.s32 %s16, 1
      %s22 = ssub.s32 %s16, 2
      %s23 = sadd.s32 %s16, 1
      %s24 = ssub.s32 %s16, %s23
      %p25 = scmp.eq.s32.totalorder %s24, 0
      %s27 = sadd.s32 %s26, 1
      %s28 = scalar_select %p25, %s26, %s27
      %p31 = pneg %p25
      %p32 = scmp.eq.s32.totalorder %s16, 1
      %p33 = por %p31, %p32
      %p34 = scmp.ne.s32.totalorder %s26, %s29
      %p35 = scmp.eq.s32.totalorder %s16, 0
      %p36 = por %p34, %p35
      %p37 = scmp.ne.s32.totalorder %s26, %s29
      %p38 = scmp.eq.s32.totalorder %s21, 1
      %p39 = por %p37, %p38
      %p40 = scmp.ne.s32.totalorder %s29, %s30
      %p41 = scmp.eq.s32.totalorder %s21, 0
      %p42 = por %p40, %p41
      %p43 = scmp.ne.s32.totalorder %s29, %s30
      %p44 = scmp.eq.s32.totalorder %s22, 1
      %p45 = por %p43, %p44
      %p47 = scmp.ne.s32.totalorder %s30, %s46
      %p48 = scmp.eq.s32.totalorder %s22, 0
      %p49 = por %p47, %p48
      %s51 = sadd.s32 %s50, 1
      %p54 = scmp.eq.s32.totalorder %s16, 1
      %p55 = scmp.ne.s32.totalorder %s50, %s52
      %p56 = scmp.eq.s32.totalorder %s16, 0
      %p57 = por %p55, %p56
      %p58 = scmp.ne.s32.totalorder %s50, %s52
      %p59 = scmp.eq.s32.totalorder %s21, 1
      %p60 = por %p58, %p59
      %p61 = scmp.ne.s32.totalorder %s52, %s53
      %p62 = scmp.eq.s32.totalorder %s21, 0
      %p63 = por %p61, %p62
      %p64 = scmp.ne.s32.totalorder %s52, %s53
      %p65 = scmp.eq.s32.totalorder %s22, 1
      %p66 = por %p64, %p65
      %p68 = scmp.ne.s32.totalorder %s53, %s67
      %p69 = scmp.eq.s32.totalorder %s22, 0
      %p70 = por %p68, %p69
      %s72 = sadd.s32 %s71, 1
      %p75 = scmp.eq.s32.totalorder %s16, 1
      %p76 = scmp.ne.s32.totalorder %s71, %s73
      %p77 = scmp.eq.s32.totalorder %s16, 0
      %p78 = por %p76, %p77
      %p79 = scmp.ne.s32.totalorder %s71, %s73
      %p80 = scmp.eq.s32.totalorder %s21, 1
      %p81 = por %p79, %p80
      %p82 = scmp.ne.s32.totalorder %s73, %s74
      %p83 = scmp.eq.s32.totalorder %s21, 0
      %p84 = por %p82, %p83
      %p85 = scmp.ne.s32.totalorder %s73, %s74
      %p86 = scmp.eq.s32.totalorder %s22, 1
      %p87 = por %p85, %p86
      %p89 = scmp.ne.s32.totalorder %s74, %s88
      %p90 = scmp.eq.s32.totalorder %s22, 0
      %p91 = por %p89, %p90
      %s93 = sadd.s32 %s92, 1
      %p96 = scmp.eq.s32.totalorder %s16, 1
      %p97 = scmp.ne.s32.totalorder %s92, %s94
      %p98 = scmp.eq.s32.totalorder %s16, 0
      %p99 = por %p97, %p98
      %p100 = scmp.ne.s32.totalorder %s92, %s94
      %p101 = scmp.eq.s32.totalorder %s21, 1
      %p102 = por %p100, %p101
      %p103 = scmp.ne.s32.totalorder %s94, %s95
      %p104 = scmp.eq.s32.totalorder %s21, 0
      %p105 = por %p103, %p104
      %p106 = scmp.ne.s32.totalorder %s94, %s95
      %p107 = scmp.eq.s32.totalorder %s22, 1
      %p108 = por %p106, %p107
      %p110 = scmp.ne.s32.totalorder %s95, %s109
      %p111 = scmp.eq.s32.totalorder %s22, 0
      %p112 = por %p110, %p111
      %s114 = sadd.s32 %s113, 1
      %p117 = scmp.eq.s32.totalorder %s16, 1
      %p118 = scmp.ne.s32.totalorder %s113, %s115
      %p119 = scmp.eq.s32.totalorder %s16, 0
      %p120 = por %p118, %p119
      %p121 = scmp.ne.s32.totalorder %s113, %s115
      %p122 = scmp.eq.s32.totalorder %s21, 1
      %p123 = por %p121, %p122
      %p124 = scmp.ne.s32.totalorder %s115, %s116
      %p125 = scmp.eq.s32.totalorder %s21, 0
      %p126 = por %p124, %p125
      %p127 = scmp.ne.s32.totalorder %s115, %s116
      %p128 = scmp.eq.s32.totalorder %s22, 1
      %p129 = por %p127, %p128
      %p131 = scmp.ne.s32.totalorder %s116, %s130
      %p132 = scmp.eq.s32.totalorder %s22, 0
      %p133 = por %p131, %p132
      %s135 = sadd.s32 %s134, 1
      %p138 = scmp.eq.s32.totalorder %s16, 1
      %p139 = scmp.ne.s32.totalorder %s134, %s136
      %p140 = scmp.eq.s32.totalorder %s16, 0
      %p141 = por %p139, %p140
      %p142 = scmp.ne.s32.totalorder %s134, %s136
      %p143 = scmp.eq.s32.totalorder %s21, 1
      %p144 = por %p142, %p143
      %p145 = scmp.ne.s32.totalorder %s136, %s137
      %p146 = scmp.eq.s32.totalorder %s21, 0
      %p147 = por %p145, %p146
      %p148 = scmp.ne.s32.totalorder %s136, %s137
      %p149 = scmp.eq.s32.totalorder %s22, 1
      %p150 = por %p148, %p149
      %p152 = scmp.ne.s32.totalorder %s137, %s151
      %p153 = scmp.eq.s32.totalorder %s22, 0
      %p154 = por %p152, %p153
      %s156 = sadd.s32 %s155, 1
      %p159 = scmp.eq.s32.totalorder %s16, 1
      %p160 = scmp.ne.s32.totalorder %s155, %s157
      %p161 = scmp.eq.s32.totalorder %s16, 0
      %p162 = por %p160, %p161
      %p163 = scmp.ne.s32.totalorder %s155, %s157
      %p164 = scmp.eq.s32.totalorder %s21, 1
      %p165 = por %p163, %p164
      %p166 = scmp.ne.s32.totalorder %s157, %s158
      %p167 = scmp.eq.s32.totalorder %s21, 0
      %p168 = por %p166, %p167
      %p169 = scmp.ne.s32.totalorder %s157, %s158
      %p170 = scmp.eq.s32.totalorder %s22, 1
      %p171 = por %p169, %p170
      %p173 = scmp.ne.s32.totalorder %s158, %s172
      %p174 = scmp.eq.s32.totalorder %s22, 0
      %p175 = por %p173, %p174
      %s176 = ssub.s32 %s16, %s23
      %p177 = scmp.eq.s32.totalorder %s176, 0
      %s179 = sadd.s32 %s178, 1
      %s180 = scalar_select %p177, %s178, %s179
      %p183 = pneg %p177
      %p184 = scmp.eq.s32.totalorder %s16, 1
      %p185 = por %p183, %p184
      %p186 = scmp.ne.s32.totalorder %s178, %s181
      %p187 = scmp.eq.s32.totalorder %s16, 0
      %p188 = por %p186, %p187
      %p189 = scmp.ne.s32.totalorder %s178, %s181
      %p190 = scmp.eq.s32.totalorder %s21, 1
      %p191 = por %p189, %p190
      %p192 = scmp.ne.s32.totalorder %s181, %s182
      %p193 = scmp.eq.s32.totalorder %s21, 0
      %p194 = por %p192, %p193
      %p195 = scmp.ne.s32.totalorder %s181, %s182
      %p196 = scmp.eq.s32.totalorder %s22, 1
      %p197 = por %p195, %p196
      %p199 = scmp.ne.s32.totalorder %s182, %s198
      %p200 = scmp.eq.s32.totalorder %s22, 0
      %p201 = por %p199, %p200
      %p202 = scmp.le.s32.totalorder 1, %s16
      %p203 = scmp.lt.s32.totalorder %s16, 3
      %p204 = pnand %p202, %p203
      %p205 = pneg %p204
      // Predicated region
      $region9: #{tpu_custom_call.1} parent=5 // pred_check
        _
      $region10: #{tpu_custom_call.1} parent=5 // pred_check_branch
        %207 = sbr.rel (%p204) target = $region12
      $region11: #{tpu_custom_call.1} parent=5 // pred_region
        %s208 = ssub.s32 %s16, 1
        // Predicated region
        $region13: #{tpu_custom_call.1} parent=11 // pred_check
          %p209 = pneg %p63
        $region14: #{tpu_custom_call.1} parent=11 // pred_check_branch
          %211 = sbr.rel (%p209) target = $region16
        $region15: #{tpu_custom_call.1} parent=11 // pred_region
          _
        $region16: #{tpu_custom_call.1} parent=11 // pred_fallthru
          _
        // Predicated region
        $region17: #{tpu_custom_call.1} parent=11 // pred_check
          %p212 = pneg %p84
        $region18: #{tpu_custom_call.1} parent=11 // pred_check_branch
          %214 = sbr.rel (%p212) target = $region20
        $region19: #{tpu_custom_call.1} parent=11 // pred_region
          _
        $region20: #{tpu_custom_call.1} parent=11 // pred_fallthru
          _
        // Predicated region
        $region21: #{tpu_custom_call.1} parent=11 // pred_check
          %p215 = pneg %p105
        $region22: #{tpu_custom_call.1} parent=11 // pred_check_branch
          %217 = sbr.rel (%p215) target = $region24
        $region23: #{tpu_custom_call.1} parent=11 // pred_region
          _
        $region24: #{tpu_custom_call.1} parent=11 // pred_fallthru
          _
        // Predicated region
        $region25: #{tpu_custom_call.1} parent=11 // pred_check
          %p218 = pneg %p126
        $region26: #{tpu_custom_call.1} parent=11 // pred_check_branch
          %220 = sbr.rel (%p218) target = $region28
        $region27: #{tpu_custom_call.1} parent=11 // pred_region
          _
        $region28: #{tpu_custom_call.1} parent=11 // pred_fallthru
          _
        // Predicated region
        $region29: #{tpu_custom_call.1} parent=11 // pred_check
          %p221 = pneg %p147
        $region30: #{tpu_custom_call.1} parent=11 // pred_check_branch
          %223 = sbr.rel (%p221) target = $region32
        $region31: #{tpu_custom_call.1} parent=11 // pred_region
          _
        $region32: #{tpu_custom_call.1} parent=11 // pred_fallthru
          _
        // Predicated region
        $region33: #{tpu_custom_call.1} parent=11 // pred_check
          %p224 = pneg %p168
        $region34: #{tpu_custom_call.1} parent=11 // pred_check_branch
          %226 = sbr.rel (%p224) target = $region36
        $region35: #{tpu_custom_call.1} parent=11 // pred_region
          _
        $region36: #{tpu_custom_call.1} parent=11 // pred_fallthru
          _
      $region12: #{tpu_custom_call.1} parent=5 // pred_fallthru
        _
      %p227 = scmp.lt.s32.totalorder %s16, 2
      // Predicated region
      $region37: #{tpu_custom_call.1} parent=5 // pred_check
        %p228 = pneg %p227
      $region38: #{tpu_custom_call.1} parent=5 // pred_check_branch
        %230 = sbr.rel (%p228) target = $region40
      $region39: #{tpu_custom_call.1} parent=5 // pred_region
        // Predicated region
        $region41: #{tpu_custom_call.1} parent=39 // pred_check
          %p231 = pneg %p36
        $region42: #{tpu_custom_call.1} parent=39 // pred_check_branch
          %233 = sbr.rel (%p231) target = $region44
        $region43: #{tpu_custom_call.1} parent=39 // pred_region
          %p234 = scmp.lt.s32.totalorder %s16, 1
          %s235 = scalar_select %p234, %s16, 1
          %s236 = smul.addr %s235, 2
          %s237 = smul.addr %s236, 4
          %s238 = scalar_lea.vmem %s0, %s237
        $region44: #{tpu_custom_call.1} parent=39 // pred_fallthru
          _
      $region40: #{tpu_custom_call.1} parent=5 // pred_fallthru
        _
      %p239 = scmp.le.s32.totalorder 1, %s16
      %p240 = scmp.lt.s32.totalorder %s16, 3
      %p241 = pnand %p239, %p240
      %p242 = pneg %p241
      // Predicated region
      $region45: #{tpu_custom_call.1} parent=5 // pred_check
        _
      $region46: #{tpu_custom_call.1} parent=5 // pred_check_branch
        %244 = sbr.rel (%p241) target = $region48
      $region47: #{tpu_custom_call.1} parent=5 // pred_region
        %s245 = ssub.s32 %s16, 1
        %p246 = scmp.lt.s32.totalorder %s21, 1
        %s247 = scalar_select %p246, %s21, 1
        %s248 = smul.addr %s247, 2
        %s249 = smul.addr %s248, 4
        %s250 = scalar_lea.vmem %s0, %s249
        %p251 = pneg %p42
        %p252 = pneg %p39
        %p253 = pneg %p63
        %p254 = pneg %p60
        %p255 = pneg %p84
        %p256 = pneg %p81
        %p257 = pneg %p105
        %p258 = pneg %p102
        %p259 = pneg %p126
        %p260 = pneg %p123
        %p261 = pneg %p147
        %p262 = pneg %p144
        %p263 = pneg %p168
        %p264 = pneg %p165
        %p265 = pneg %p194
        %p266 = pneg %p191
        %s267 = sand.u32 %s181, 1
        %s268 = scalar_lea.sflag [#allocation3], %s267
        %s269 = sand.u32 %s181, 1
        %s270 = smul.addr %s269, 8
        %s271 = scalar_lea.vmem [#allocation2], %s270
        %p272 = scmp.lt.s32.totalorder %s21, 1
        %s273 = scalar_select %p272, %s21, 1
        %s274 = smul.addr %s273, 2
        %s275 = smul.addr %s274, 4
        %s276 = scalar_lea.vmem %s0, %s275
        %v277 = vld [vmem:[%s276] sm:$0xff]
        %v278 = vld [vmem:[%s1] sm:$0xff]
        %v279 = vld [vmem:[%s1 + $0x8] sm:$0xff]
        %v280 = vld [vmem:[%s1 + $0x10] sm:$0xff]
        %v281 = vld [vmem:[%s1 + $0x18] sm:$0xff]
        %v282 = vld [vmem:[%s2] sm:$0xff]
        %v283 = vld [vmem:[%s2 + $0x8] sm:$0xff]
        %v284 = vld [vmem:[%s2 + $0x10] sm:$0xff]
        %v285 = vld [vmem:[%s2 + $0x18] sm:$0xff]
        %287 = vset.pattern.permute.xlu0 0
        %288 = vperm.xlu0 %287, %v278
        %v289 = vpop.permute.xlu0 %288
        %292 = vset.pattern.permute.xlu0 0
        %293 = vperm.xlu0 %292, %v279
        %v294 = vpop.permute.xlu0 %293
        %297 = vset.pattern.permute.xlu0 0
        %298 = vperm.xlu0 %297, %v280
        %v299 = vpop.permute.xlu0 %298
        %302 = vset.pattern.permute.xlu0 0
        %303 = vperm.xlu0 %302, %v281
        %v304 = vpop.permute.xlu0 %303
        %v307 = vlaneseq
        %v308 = vshrl.u32 %v307, 7
        %v309 = vsub.s32 0, %v308
        %v310 = vrot.slane %v277, %v309
        %v311 = vlaneseq
        %v312 = vshrl.u32 %v311, 7
        %v313 = vsub.s32 4, %v312
        %v314 = vrot.slane %v277, %v313
        %v317 = vlaneseq
        %v318 = vshrl.u32 %v317, 7
        %v319 = vsub.s32 0, %v318
        %v320 = vrot.slane %v310, %v319
        %v321 = vlaneseq
        %v322 = vshrl.u32 %v321, 7
        %v323 = vsub.s32 0, %v322
        %v324 = vrot.slane %v314, %v323
        %v325 = vmul.f32 %v289, %v320
        %v326 = vmul.f32 %v289, %v324
        %v327 = vmul.f32 %v294, %v320
        %v328 = vmul.f32 %v294, %v324
        %v329 = vmul.f32 %v299, %v320
        %v330 = vmul.f32 %v299, %v324
        %v331 = vmul.f32 %v304, %v320
        %v332 = vmul.f32 %v304, %v324
        %334 = vset.pattern.permute.xlu0 0
        %335 = vperm.xlu0 %334, %v282
        %v336 = vpop.permute.xlu0 %335
        %339 = vset.pattern.permute.xlu0 0
        %340 = vperm.xlu0 %339, %v283
        %v341 = vpop.permute.xlu0 %340
        %344 = vset.pattern.permute.xlu0 0
        %345 = vperm.xlu0 %344, %v284
        %v346 = vpop.permute.xlu0 %345
        %349 = vset.pattern.permute.xlu0 0
        %350 = vperm.xlu0 %349, %v285
        %v351 = vpop.permute.xlu0 %350
        %v353 = vadd.f32 %v336, %v325
        %v354 = vadd.f32 %v336, %v326
        %v355 = vadd.f32 %v341, %v327
        %v356 = vadd.f32 %v341, %v328
        %v357 = vadd.f32 %v346, %v329
        %v358 = vadd.f32 %v346, %v330
        %v359 = vadd.f32 %v351, %v331
        %v360 = vadd.f32 %v351, %v332
        %361 = vset.pattern.permute.xlu0 1
        %362 = vperm.xlu0 %361, %v278
        %v363 = vpop.permute.xlu0 %362
        %365 = vset.pattern.permute.xlu0 1
        %366 = vperm.xlu0 %365, %v279
        %v367 = vpop.permute.xlu0 %366
        %369 = vset.pattern.permute.xlu0 1
        %370 = vperm.xlu0 %369, %v280
        %v371 = vpop.permute.xlu0 %370
        %373 = vset.pattern.permute.xlu0 1
        %374 = vperm.xlu0 %373, %v281
        %v375 = vpop.permute.xlu0 %374
        %v377 = vlaneseq
        %v378 = vshrl.u32 %v377, 7
        %v379 = vsub.s32 1, %v378
        %v380 = vrot.slane %v277, %v379
        %v381 = vlaneseq
        %v382 = vshrl.u32 %v381, 7
        %v383 = vsub.s32 5, %v382
        %v384 = vrot.slane %v277, %v383
        %v387 = vlaneseq
        %v388 = vshrl.u32 %v387, 7
        %v389 = vsub.s32 1, %v388
        %v390 = vrot.slane %v380, %v389
        %v391 = vlaneseq
        %v392 = vshrl.u32 %v391, 7
        %v393 = vsub.s32 1, %v392
        %v394 = vrot.slane %v384, %v393
        %v395 = vmul.f32 %v363, %v390
        %v396 = vmul.f32 %v363, %v394
        %v397 = vmul.f32 %v367, %v390
        %v398 = vmul.f32 %v367, %v394
        %v399 = vmul.f32 %v371, %v390
        %v400 = vmul.f32 %v371, %v394
        %v401 = vmul.f32 %v375, %v390
        %v402 = vmul.f32 %v375, %v394
        %v403 = vadd.f32 %v353, %v395
        %v404 = vadd.f32 %v354, %v396
        %v405 = vadd.f32 %v355, %v397
        %v406 = vadd.f32 %v356, %v398
        %v407 = vadd.f32 %v357, %v399
        %v408 = vadd.f32 %v358, %v400
        %v409 = vadd.f32 %v359, %v401
        %v410 = vadd.f32 %v360, %v402
        %411 = vset.pattern.permute.xlu0 2
        %412 = vperm.xlu0 %411, %v278
        %v413 = vpop.permute.xlu0 %412
        %415 = vset.pattern.permute.xlu0 2
        %416 = vperm.xlu0 %415, %v279
        %v417 = vpop.permute.xlu0 %416
        %419 = vset.pattern.permute.xlu0 2
        %420 = vperm.xlu0 %419, %v280
        %v421 = vpop.permute.xlu0 %420
        %423 = vset.pattern.permute.xlu0 2
        %424 = vperm.xlu0 %423, %v281
        %v425 = vpop.permute.xlu0 %424
        %v427 = vlaneseq
        %v428 = vshrl.u32 %v427, 7
        %v429 = vsub.s32 2, %v428
        %v430 = vrot.slane %v277, %v429
        %v431 = vlaneseq
        %v432 = vshrl.u32 %v431, 7
        %v433 = vsub.s32 6, %v432
        %v434 = vrot.slane %v277, %v433
        %v437 = vlaneseq
        %v438 = vshrl.u32 %v437, 7
        %v439 = vsub.s32 2, %v438
        %v440 = vrot.slane %v430, %v439
        %v441 = vlaneseq
        %v442 = vshrl.u32 %v441, 7
        %v443 = vsub.s32 2, %v442
        %v444 = vrot.slane %v434, %v443
        %v445 = vmul.f32 %v413, %v440
        %v446 = vmul.f32 %v413, %v444
        %v447 = vmul.f32 %v417, %v440
        %v448 = vmul.f32 %v417, %v444
        %v449 = vmul.f32 %v421, %v440
        %v450 = vmul.f32 %v421, %v444
        %v451 = vmul.f32 %v425, %v440
        %v452 = vmul.f32 %v425, %v444
        %v453 = vadd.f32 %v403, %v445
        %v454 = vadd.f32 %v404, %v446
        %v455 = vadd.f32 %v405, %v447
        %v456 = vadd.f32 %v406, %v448
        %v457 = vadd.f32 %v407, %v449
        %v458 = vadd.f32 %v408, %v450
        %v459 = vadd.f32 %v409, %v451
        %v460 = vadd.f32 %v410, %v452
        %461 = vset.pattern.permute.xlu0 3
        %462 = vperm.xlu0 %461, %v278
        %v463 = vpop.permute.xlu0 %462
        %465 = vset.pattern.permute.xlu0 3
        %466 = vperm.xlu0 %465, %v279
        %v467 = vpop.permute.xlu0 %466
        %469 = vset.pattern.permute.xlu0 3
        %470 = vperm.xlu0 %469, %v280
        %v471 = vpop.permute.xlu0 %470
        %473 = vset.pattern.permute.xlu0 3
        %474 = vperm.xlu0 %473, %v281
        %v475 = vpop.permute.xlu0 %474
        %v477 = vlaneseq
        %v478 = vshrl.u32 %v477, 7
        %v479 = vsub.s32 3, %v478
        %v480 = vrot.slane %v277, %v479
        %v481 = vlaneseq
        %v482 = vshrl.u32 %v481, 7
        %v483 = vsub.s32 7, %v482
        %v484 = vrot.slane %v277, %v483
        %v487 = vlaneseq
        %v488 = vshrl.u32 %v487, 7
        %v489 = vsub.s32 3, %v488
        %v490 = vrot.slane %v480, %v489
        %v491 = vlaneseq
        %v492 = vshrl.u32 %v491, 7
        %v493 = vsub.s32 3, %v492
        %v494 = vrot.slane %v484, %v493
        %v495 = vmul.f32 %v463, %v490
        %v496 = vmul.f32 %v463, %v494
        %v497 = vmul.f32 %v467, %v490
        %v498 = vmul.f32 %v467, %v494
        %v499 = vmul.f32 %v471, %v490
        %v500 = vmul.f32 %v471, %v494
        %v501 = vmul.f32 %v475, %v490
        %v502 = vmul.f32 %v475, %v494
        %v503 = vadd.f32 %v453, %v495
        %v504 = vadd.f32 %v454, %v496
        %v505 = vadd.f32 %v455, %v497
        %v506 = vadd.f32 %v456, %v498
        %v507 = vadd.f32 %v457, %v499
        %v508 = vadd.f32 %v458, %v500
        %v509 = vadd.f32 %v459, %v501
        %v510 = vadd.f32 %v460, %v502
        %v511 = vmax.f32 %v503, 0.0
        %v512 = vmax.f32 %v504, 0.0
        %v513 = vmax.f32 %v505, 0.0
        %v514 = vmax.f32 %v506, 0.0
        %v515 = vmax.f32 %v507, 0.0
        %v516 = vmax.f32 %v508, 0.0
        %v517 = vmax.f32 %v509, 0.0
        %v518 = vmax.f32 %v510, 0.0
        %v519 = vld [vmem:[%s3] sm:$0xff]
        %v520 = vld [vmem:[%s3 + $0x8] sm:$0xff]
        %v521 = vld [vmem:[%s3 + $0x10] sm:$0xff]
        %v522 = vld [vmem:[%s3 + $0x18] sm:$0xff]
        %v523 = vld [vmem:[%s4] sm:$0xff]
        %v524 = vld [vmem:[%s4 + $0x8] sm:$0xff]
        %v525 = vld [vmem:[%s4 + $0x10] sm:$0xff]
        %v526 = vld [vmem:[%s4 + $0x18] sm:$0xff]
        %528 = vset.pattern.permute.xlu0 0
        %529 = vperm.xlu0 %528, %v523
        %v530 = vpop.permute.xlu0 %529
        %533 = vset.pattern.permute.xlu0 0
        %534 = vperm.xlu0 %533, %v524
        %v535 = vpop.permute.xlu0 %534
        %538 = vset.pattern.permute.xlu0 0
        %539 = vperm.xlu0 %538, %v525
        %v540 = vpop.permute.xlu0 %539
        %543 = vset.pattern.permute.xlu0 0
        %544 = vperm.xlu0 %543, %v526
        %v545 = vpop.permute.xlu0 %544
        %vm547 = vcmask 261120
        %v549 = vsel %vm547, %v519, 0
        %v552 = vsel %vm547, %v520, 0
        %v555 = vsel %vm547, %v521, 0
        %v558 = vsel %vm547, %v522, 0
        %560 = vmatprep.subr.mxu0 0.0
        %561 = vmatpush1.msra.mxu0 0.0
        %562 = vmatprep.subr.mxu0 0.0
        %563 = vmatpush1.msra.mxu0 0.0
        %564 = vmatprep.subr.mxu0 0.0
        %565 = vmatpush1.msra.mxu0 0.0
        %566 = vmatprep.subr.mxu0 0.0
        %567 = vmatpush1.msra.mxu0 0.0
        %568 = vmatprep.subr.mxu0 0.0
        %569 = vmatpush1.msra.mxu0 0.0
        %570 = vmatprep.subr.mxu0 0.0
        %571 = vmatpush1.msra.mxu0 0.0
        %572 = vmatprep.subr.mxu0 0.0
        %573 = vmatpush1.msra.mxu0 0.0
        %574 = vmatprep.subr.mxu0 0.0
        %575 = vmatpush1.msra.mxu0 0.0
        %576 = vmatprep.subr.mxu0 0.0
        %577 = vmatpush1.msra.mxu0 0.0
        %578 = vmatprep.subr.mxu0 0.0
        %579 = vmatpush1.msra.mxu0 0.0
        %580 = vmatprep.subr.mxu0 0.0
        %581 = vmatpush1.msra.mxu0 0.0
        %582 = vmatprep.subr.mxu0 0.0
        %583 = vmatpush1.msra.mxu0 0.0
        %584 = vmatprep.subr.mxu0 %v518
        %585 = vmatpush1.msra.mxu0 %v517
        %586 = vmatprep.subr.mxu0 %v516
        %587 = vmatpush1.msra.mxu0 %v515
        %588 = vmatprep.subr.mxu0 %v514
        %589 = vmatpush1.msra.mxu0 %v513
        %590 = vmatprep.subr.mxu0 %v512
        %591 = vmatpush1.msra.mxu0 %v511
        %592 = vmatprep.subr.mxu0 0.0
        %593 = vmatpush2.msra.mxu0 0.0
        %594 = vmatprep.subr.mxu0 0.0
        %595 = vmatpush2.msra.mxu0 0.0
        %596 = vmatprep.subr.mxu0 0.0
        %597 = vmatpush2.msra.mxu0 0.0
        %598 = vmatprep.subr.mxu0 0.0
        %599 = vmatpush2.msra.mxu0 0.0
        %600 = vmatprep.subr.mxu0 0.0
        %601 = vmatpush2.msra.mxu0 0.0
        %602 = vmatprep.subr.mxu0 0.0
        %603 = vmatpush2.msra.mxu0 0.0
        %604 = vmatprep.subr.mxu0 0.0
        %605 = vmatpush2.msra.mxu0 0.0
        %606 = vmatprep.subr.mxu0 0.0
        %607 = vmatpush2.msra.mxu0 0.0
        %608 = vmatprep.subr.mxu0 0.0
        %609 = vmatpush2.msra.mxu0 0.0
        %610 = vmatprep.subr.mxu0 0.0
        %611 = vmatpush2.msra.mxu0 0.0
        %612 = vmatprep.subr.mxu0 0.0
        %613 = vmatpush2.msra.mxu0 0.0
        %614 = vmatprep.subr.mxu0 0.0
        %615 = vmatpush2.msra.mxu0 0.0
        %616 = vmatprep.subr.mxu0 0.0
        %617 = vmatpush2.msra.mxu0 0.0
        %618 = vmatprep.subr.mxu0 0.0
        %619 = vmatpush2.msra.mxu0 0.0
        %620 = vmatprep.subr.mxu0 0.0
        %621 = vmatpush2.msra.mxu0 0.0
        %622 = vmatprep.subr.mxu0 0.0
        %623 = vmatpush2.msra.mxu0 0.0
        %624 = vmatprep.mubr.f32.mxu0 0.0
        %625 = vmatmul.mubr.f32.gmra.mxu0 %v549
        %v626 = vpop.f32.mrf.mxu0
        %v627 = vadd.f32 %v530, %v626
        %v628 = vpop.f32.mrf.mxu0
        %v629 = vadd.f32 %v530, %v628
        %630 = vmatprep.mubr.f32.mxu0 0.0
        %631 = vmatmul.mubr.f32.gmra.mxu0 %v552
        %v632 = vpop.f32.mrf.mxu0
        %v633 = vadd.f32 %v535, %v632
        %v634 = vpop.f32.mrf.mxu0
        %v635 = vadd.f32 %v535, %v634
        %636 = vmatprep.mubr.f32.mxu0 0.0
        %637 = vmatmul.mubr.f32.gmra.mxu0 %v555
        %v638 = vpop.f32.mrf.mxu0
        %v639 = vadd.f32 %v540, %v638
        %v640 = vpop.f32.mrf.mxu0
        %v641 = vadd.f32 %v540, %v640
        %642 = vmatprep.mubr.f32.mxu0 0.0
        %643 = vmatmul.mubr.f32.gmra.mxu0 %v558
        %v644 = vpop.f32.mrf.mxu0
        %v645 = vadd.f32 %v545, %v644
        %v646 = vpop.f32.mrf.mxu0
        %v647 = vadd.f32 %v545, %v646
        %648 = vdwg.mxu0
        %v649 = vmax.f32 %v627, 0.0
        %v650 = vmax.f32 %v629, 0.0
        %v651 = vmax.f32 %v633, 0.0
        %v652 = vmax.f32 %v635, 0.0
        %v653 = vmax.f32 %v639, 0.0
        %v654 = vmax.f32 %v641, 0.0
        %v655 = vmax.f32 %v645, 0.0
        %v656 = vmax.f32 %v647, 0.0
        %v657 = vld [vmem:[%s5] sm:$0xf]
        %v658 = vld [vmem:[%s6] sm:$0xf]
        %660 = vset.pattern.permute.xlu0 0
        %661 = vperm.xlu0 %660, %v657
        %v662 = vpop.permute.xlu0 %661
        %v664 = vlaneseq
        %v665 = vshrl.u32 %v664, 7
        %v666 = vsub.s32 0, %v665
        %v667 = vrot.slane %v649, %v666
        %v668 = vlaneseq
        %v669 = vshrl.u32 %v668, 7
        %v670 = vsub.s32 0, %v669
        %v671 = vrot.slane %v650, %v670
        %v672 = vmul.f32 %v662, %v667
        %v673 = vmul.f32 %v662, %v671
        %675 = vset.pattern.permute.xlu0 0
        %676 = vperm.xlu0 %675, %v658
        %v677 = vpop.permute.xlu0 %676
        %v679 = vadd.f32 %v677, %v672
        %v680 = vadd.f32 %v677, %v673
        %681 = vset.pattern.permute.xlu0 1
        %682 = vperm.xlu0 %681, %v657
        %v683 = vpop.permute.xlu0 %682
        %v685 = vlaneseq
        %v686 = vshrl.u32 %v685, 7
        %v687 = vsub.s32 1, %v686
        %v688 = vrot.slane %v649, %v687
        %v689 = vlaneseq
        %v690 = vshrl.u32 %v689, 7
        %v691 = vsub.s32 1, %v690
        %v692 = vrot.slane %v650, %v691
        %v693 = vmul.f32 %v683, %v688
        %v694 = vmul.f32 %v683, %v692
        %v695 = vadd.f32 %v679, %v693
        %v696 = vadd.f32 %v680, %v694
        %697 = vset.pattern.permute.xlu0 2
        %698 = vperm.xlu0 %697, %v657
        %v699 = vpop.permute.xlu0 %698
        %v701 = vlaneseq
        %v702 = vshrl.u32 %v701, 7
        %v703 = vsub.s32 2, %v702
        %v704 = vrot.slane %v649, %v703
        %v705 = vlaneseq
        %v706 = vshrl.u32 %v705, 7
        %v707 = vsub.s32 2, %v706
        %v708 = vrot.slane %v650, %v707
        %v709 = vmul.f32 %v699, %v704
        %v710 = vmul.f32 %v699, %v708
        %v711 = vadd.f32 %v695, %v709
        %v712 = vadd.f32 %v696, %v710
        %713 = vset.pattern.permute.xlu0 3
        %714 = vperm.xlu0 %713, %v657
        %v715 = vpop.permute.xlu0 %714
        %v717 = vlaneseq
        %v718 = vshrl.u32 %v717, 7
        %v719 = vsub.s32 3, %v718
        %v720 = vrot.slane %v649, %v719
        %v721 = vlaneseq
        %v722 = vshrl.u32 %v721, 7
        %v723 = vsub.s32 3, %v722
        %v724 = vrot.slane %v650, %v723
        %v725 = vmul.f32 %v715, %v720
        %v726 = vmul.f32 %v715, %v724
        %v727 = vadd.f32 %v711, %v725
        %v728 = vadd.f32 %v712, %v726
        %729 = vset.pattern.permute.xlu0 4
        %730 = vperm.xlu0 %729, %v657
        %v731 = vpop.permute.xlu0 %730
        %v733 = vlaneseq
        %v734 = vshrl.u32 %v733, 7
        %v735 = vsub.s32 4, %v734
        %v736 = vrot.slane %v649, %v735
        %v737 = vlaneseq
        %v738 = vshrl.u32 %v737, 7
        %v739 = vsub.s32 4, %v738
        %v740 = vrot.slane %v650, %v739
        %v741 = vmul.f32 %v731, %v736
        %v742 = vmul.f32 %v731, %v740
        %v743 = vadd.f32 %v727, %v741
        %v744 = vadd.f32 %v728, %v742
        %745 = vset.pattern.permute.xlu0 5
        %746 = vperm.xlu0 %745, %v657
        %v747 = vpop.permute.xlu0 %746
        %v749 = vlaneseq
        %v750 = vshrl.u32 %v749, 7
        %v751 = vsub.s32 5, %v750
        %v752 = vrot.slane %v649, %v751
        %v753 = vlaneseq
        %v754 = vshrl.u32 %v753, 7
        %v755 = vsub.s32 5, %v754
        %v756 = vrot.slane %v650, %v755
        %v757 = vmul.f32 %v747, %v752
        %v758 = vmul.f32 %v747, %v756
        %v759 = vadd.f32 %v743, %v757
        %v760 = vadd.f32 %v744, %v758
        %761 = vset.pattern.permute.xlu0 6
        %762 = vperm.xlu0 %761, %v657
        %v763 = vpop.permute.xlu0 %762
        %v765 = vlaneseq
        %v766 = vshrl.u32 %v765, 7
        %v767 = vsub.s32 6, %v766
        %v768 = vrot.slane %v649, %v767
        %v769 = vlaneseq
        %v770 = vshrl.u32 %v769, 7
        %v771 = vsub.s32 6, %v770
        %v772 = vrot.slane %v650, %v771
        %v773 = vmul.f32 %v763, %v768
        %v774 = vmul.f32 %v763, %v772
        %v775 = vadd.f32 %v759, %v773
        %v776 = vadd.f32 %v760, %v774
        %777 = vset.pattern.permute.xlu0 7
        %778 = vperm.xlu0 %777, %v657
        %v779 = vpop.permute.xlu0 %778
        %v781 = vlaneseq
        %v782 = vshrl.u32 %v781, 7
        %v783 = vsub.s32 7, %v782
        %v784 = vrot.slane %v649, %v783
        %v785 = vlaneseq
        %v786 = vshrl.u32 %v785, 7
        %v787 = vsub.s32 7, %v786
        %v788 = vrot.slane %v650, %v787
        %v789 = vmul.f32 %v779, %v784
        %v790 = vmul.f32 %v779, %v788
        %v791 = vadd.f32 %v775, %v789
        %v792 = vadd.f32 %v776, %v790
        %793 = vset.pattern.permute.xlu0 8
        %794 = vperm.xlu0 %793, %v657
        %v795 = vpop.permute.xlu0 %794
        %v797 = vlaneseq
        %v798 = vshrl.u32 %v797, 7
        %v799 = vsub.s32 0, %v798
        %v800 = vrot.slane %v651, %v799
        %v801 = vlaneseq
        %v802 = vshrl.u32 %v801, 7
        %v803 = vsub.s32 0, %v802
        %v804 = vrot.slane %v652, %v803
        %v805 = vmul.f32 %v795, %v800
        %v806 = vmul.f32 %v795, %v804
        %v807 = vadd.f32 %v791, %v805
        %v808 = vadd.f32 %v792, %v806
        %809 = vset.pattern.permute.xlu0 9
        %810 = vperm.xlu0 %809, %v657
        %v811 = vpop.permute.xlu0 %810
        %v813 = vlaneseq
        %v814 = vshrl.u32 %v813, 7
        %v815 = vsub.s32 1, %v814
        %v816 = vrot.slane %v651, %v815
        %v817 = vlaneseq
        %v818 = vshrl.u32 %v817, 7
        %v819 = vsub.s32 1, %v818
        %v820 = vrot.slane %v652, %v819
        %v821 = vmul.f32 %v811, %v816
        %v822 = vmul.f32 %v811, %v820
        %v823 = vadd.f32 %v807, %v821
        %v824 = vadd.f32 %v808, %v822
        %825 = vset.pattern.permute.xlu0 10
        %826 = vperm.xlu0 %825, %v657
        %v827 = vpop.permute.xlu0 %826
        %v829 = vlaneseq
        %v830 = vshrl.u32 %v829, 7
        %v831 = vsub.s32 2, %v830
        %v832 = vrot.slane %v651, %v831
        %v833 = vlaneseq
        %v834 = vshrl.u32 %v833, 7
        %v835 = vsub.s32 2, %v834
        %v836 = vrot.slane %v652, %v835
        %v837 = vmul.f32 %v827, %v832
        %v838 = vmul.f32 %v827, %v836
        %v839 = vadd.f32 %v823, %v837
        %v840 = vadd.f32 %v824, %v838
        %841 = vset.pattern.permute.xlu0 11
        %842 = vperm.xlu0 %841, %v657
        %v843 = vpop.permute.xlu0 %842
        %v845 = vlaneseq
        %v846 = vshrl.u32 %v845, 7
        %v847 = vsub.s32 3, %v846
        %v848 = vrot.slane %v651, %v847
        %v849 = vlaneseq
        %v850 = vshrl.u32 %v849, 7
        %v851 = vsub.s32 3, %v850
        %v852 = vrot.slane %v652, %v851
        %v853 = vmul.f32 %v843, %v848
        %v854 = vmul.f32 %v843, %v852
        %v855 = vadd.f32 %v839, %v853
        %v856 = vadd.f32 %v840, %v854
        %857 = vset.pattern.permute.xlu0 12
        %858 = vperm.xlu0 %857, %v657
        %v859 = vpop.permute.xlu0 %858
        %v861 = vlaneseq
        %v862 = vshrl.u32 %v861, 7
        %v863 = vsub.s32 4, %v862
        %v864 = vrot.slane %v651, %v863
        %v865 = vlaneseq
        %v866 = vshrl.u32 %v865, 7
        %v867 = vsub.s32 4, %v866
        %v868 = vrot.slane %v652, %v867
        %v869 = vmul.f32 %v859, %v864
        %v870 = vmul.f32 %v859, %v868
        %v871 = vadd.f32 %v855, %v869
        %v872 = vadd.f32 %v856, %v870
        %873 = vset.pattern.permute.xlu0 13
        %874 = vperm.xlu0 %873, %v657
        %v875 = vpop.permute.xlu0 %874
        %v877 = vlaneseq
        %v878 = vshrl.u32 %v877, 7
        %v879 = vsub.s32 5, %v878
        %v880 = vrot.slane %v651, %v879
        %v881 = vlaneseq
        %v882 = vshrl.u32 %v881, 7
        %v883 = vsub.s32 5, %v882
        %v884 = vrot.slane %v652, %v883
        %v885 = vmul.f32 %v875, %v880
        %v886 = vmul.f32 %v875, %v884
        %v887 = vadd.f32 %v871, %v885
        %v888 = vadd.f32 %v872, %v886
        %889 = vset.pattern.permute.xlu0 14
        %890 = vperm.xlu0 %889, %v657
        %v891 = vpop.permute.xlu0 %890
        %v893 = vlaneseq
        %v894 = vshrl.u32 %v893, 7
        %v895 = vsub.s32 6, %v894
        %v896 = vrot.slane %v651, %v895
        %v897 = vlaneseq
        %v898 = vshrl.u32 %v897, 7
        %v899 = vsub.s32 6, %v898
        %v900 = vrot.slane %v652, %v899
        %v901 = vmul.f32 %v891, %v896
        %v902 = vmul.f32 %v891, %v900
        %v903 = vadd.f32 %v887, %v901
        %v904 = vadd.f32 %v888, %v902
        %905 = vset.pattern.permute.xlu0 15
        %906 = vperm.xlu0 %905, %v657
        %v907 = vpop.permute.xlu0 %906
        %v909 = vlaneseq
        %v910 = vshrl.u32 %v909, 7
        %v911 = vsub.s32 7, %v910
        %v912 = vrot.slane %v651, %v911
        %v913 = vlaneseq
        %v914 = vshrl.u32 %v913, 7
        %v915 = vsub.s32 7, %v914
        %v916 = vrot.slane %v652, %v915
        %v917 = vmul.f32 %v907, %v912
        %v918 = vmul.f32 %v907, %v916
        %v919 = vadd.f32 %v903, %v917
        %v920 = vadd.f32 %v904, %v918
        %921 = vset.pattern.permute.xlu0 16
        %922 = vperm.xlu0 %921, %v657
        %v923 = vpop.permute.xlu0 %922
        %v925 = vlaneseq
        %v926 = vshrl.u32 %v925, 7
        %v927 = vsub.s32 0, %v926
        %v928 = vrot.slane %v653, %v927
        %v929 = vlaneseq
        %v930 = vshrl.u32 %v929, 7
        %v931 = vsub.s32 0, %v930
        %v932 = vrot.slane %v654, %v931
        %v933 = vmul.f32 %v923, %v928
        %v934 = vmul.f32 %v923, %v932
        %v935 = vadd.f32 %v919, %v933
        %v936 = vadd.f32 %v920, %v934
        %937 = vset.pattern.permute.xlu0 17
        %938 = vperm.xlu0 %937, %v657
        %v939 = vpop.permute.xlu0 %938
        %v941 = vlaneseq
        %v942 = vshrl.u32 %v941, 7
        %v943 = vsub.s32 1, %v942
        %v944 = vrot.slane %v653, %v943
        %v945 = vlaneseq
        %v946 = vshrl.u32 %v945, 7
        %v947 = vsub.s32 1, %v946
        %v948 = vrot.slane %v654, %v947
        %v949 = vmul.f32 %v939, %v944
        %v950 = vmul.f32 %v939, %v948
        %v951 = vadd.f32 %v935, %v949
        %v952 = vadd.f32 %v936, %v950
        %953 = vset.pattern.permute.xlu0 18
        %954 = vperm.xlu0 %953, %v657
        %v955 = vpop.permute.xlu0 %954
        %v957 = vlaneseq
        %v958 = vshrl.u32 %v957, 7
        %v959 = vsub.s32 2, %v958
        %v960 = vrot.slane %v653, %v959
        %v961 = vlaneseq
        %v962 = vshrl.u32 %v961, 7
        %v963 = vsub.s32 2, %v962
        %v964 = vrot.slane %v654, %v963
        %v965 = vmul.f32 %v955, %v960
        %v966 = vmul.f32 %v955, %v964
        %v967 = vadd.f32 %v951, %v965
        %v968 = vadd.f32 %v952, %v966
        %969 = vset.pattern.permute.xlu0 19
        %970 = vperm.xlu0 %969, %v657
        %v971 = vpop.permute.xlu0 %970
        %v973 = vlaneseq
        %v974 = vshrl.u32 %v973, 7
        %v975 = vsub.s32 3, %v974
        %v976 = vrot.slane %v653, %v975
        %v977 = vlaneseq
        %v978 = vshrl.u32 %v977, 7
        %v979 = vsub.s32 3, %v978
        %v980 = vrot.slane %v654, %v979
        %v981 = vmul.f32 %v971, %v976
        %v982 = vmul.f32 %v971, %v980
        %v983 = vadd.f32 %v967, %v981
        %v984 = vadd.f32 %v968, %v982
        %985 = vset.pattern.permute.xlu0 20
        %986 = vperm.xlu0 %985, %v657
        %v987 = vpop.permute.xlu0 %986
        %v989 = vlaneseq
        %v990 = vshrl.u32 %v989, 7
        %v991 = vsub.s32 4, %v990
        %v992 = vrot.slane %v653, %v991
        %v993 = vlaneseq
        %v994 = vshrl.u32 %v993, 7
        %v995 = vsub.s32 4, %v994
        %v996 = vrot.slane %v654, %v995
        %v997 = vmul.f32 %v987, %v992
        %v998 = vmul.f32 %v987, %v996
        %v999 = vadd.f32 %v983, %v997
        %v1000 = vadd.f32 %v984, %v998
        %1001 = vset.pattern.permute.xlu0 21
        %1002 = vperm.xlu0 %1001, %v657
        %v1003 = vpop.permute.xlu0 %1002
        %v1005 = vlaneseq
        %v1006 = vshrl.u32 %v1005, 7
        %v1007 = vsub.s32 5, %v1006
        %v1008 = vrot.slane %v653, %v1007
        %v1009 = vlaneseq
        %v1010 = vshrl.u32 %v1009, 7
        %v1011 = vsub.s32 5, %v1010
        %v1012 = vrot.slane %v654, %v1011
        %v1013 = vmul.f32 %v1003, %v1008
        %v1014 = vmul.f32 %v1003, %v1012
        %v1015 = vadd.f32 %v999, %v1013
        %v1016 = vadd.f32 %v1000, %v1014
        %1017 = vset.pattern.permute.xlu0 22
        %1018 = vperm.xlu0 %1017, %v657
        %v1019 = vpop.permute.xlu0 %1018
        %v1021 = vlaneseq
        %v1022 = vshrl.u32 %v1021, 7
        %v1023 = vsub.s32 6, %v1022
        %v1024 = vrot.slane %v653, %v1023
        %v1025 = vlaneseq
        %v1026 = vshrl.u32 %v1025, 7
        %v1027 = vsub.s32 6, %v1026
        %v1028 = vrot.slane %v654, %v1027
        %v1029 = vmul.f32 %v1019, %v1024
        %v1030 = vmul.f32 %v1019, %v1028
        %v1031 = vadd.f32 %v1015, %v1029
        %v1032 = vadd.f32 %v1016, %v1030
        %1033 = vset.pattern.permute.xlu0 23
        %1034 = vperm.xlu0 %1033, %v657
        %v1035 = vpop.permute.xlu0 %1034
        %v1037 = vlaneseq
        %v1038 = vshrl.u32 %v1037, 7
        %v1039 = vsub.s32 7, %v1038
        %v1040 = vrot.slane %v653, %v1039
        %v1041 = vlaneseq
        %v1042 = vshrl.u32 %v1041, 7
        %v1043 = vsub.s32 7, %v1042
        %v1044 = vrot.slane %v654, %v1043
        %v1045 = vmul.f32 %v1035, %v1040
        %v1046 = vmul.f32 %v1035, %v1044
        %v1047 = vadd.f32 %v1031, %v1045
        %v1048 = vadd.f32 %v1032, %v1046
        %1049 = vset.pattern.permute.xlu0 24
        %1050 = vperm.xlu0 %1049, %v657
        %v1051 = vpop.permute.xlu0 %1050
        %v1053 = vlaneseq
        %v1054 = vshrl.u32 %v1053, 7
        %v1055 = vsub.s32 0, %v1054
        %v1056 = vrot.slane %v655, %v1055
        %v1057 = vlaneseq
        %v1058 = vshrl.u32 %v1057, 7
        %v1059 = vsub.s32 0, %v1058
        %v1060 = vrot.slane %v656, %v1059
        %v1061 = vmul.f32 %v1051, %v1056
        %v1062 = vmul.f32 %v1051, %v1060
        %v1063 = vadd.f32 %v1047, %v1061
        %v1064 = vadd.f32 %v1048, %v1062
        %1065 = vset.pattern.permute.xlu0 25
        %1066 = vperm.xlu0 %1065, %v657
        %v1067 = vpop.permute.xlu0 %1066
        %v1069 = vlaneseq
        %v1070 = vshrl.u32 %v1069, 7
        %v1071 = vsub.s32 1, %v1070
        %v1072 = vrot.slane %v655, %v1071
        %v1073 = vlaneseq
        %v1074 = vshrl.u32 %v1073, 7
        %v1075 = vsub.s32 1, %v1074
        %v1076 = vrot.slane %v656, %v1075
        %v1077 = vmul.f32 %v1067, %v1072
        %v1078 = vmul.f32 %v1067, %v1076
        %v1079 = vadd.f32 %v1063, %v1077
        %v1080 = vadd.f32 %v1064, %v1078
        %1081 = vset.pattern.permute.xlu0 26
        %1082 = vperm.xlu0 %1081, %v657
        %v1083 = vpop.permute.xlu0 %1082
        %v1085 = vlaneseq
        %v1086 = vshrl.u32 %v1085, 7
        %v1087 = vsub.s32 2, %v1086
        %v1088 = vrot.slane %v655, %v1087
        %v1089 = vlaneseq
        %v1090 = vshrl.u32 %v1089, 7
        %v1091 = vsub.s32 2, %v1090
        %v1092 = vrot.slane %v656, %v1091
        %v1093 = vmul.f32 %v1083, %v1088
        %v1094 = vmul.f32 %v1083, %v1092
        %v1095 = vadd.f32 %v1079, %v1093
        %v1096 = vadd.f32 %v1080, %v1094
        %1097 = vset.pattern.permute.xlu0 27
        %1098 = vperm.xlu0 %1097, %v657
        %v1099 = vpop.permute.xlu0 %1098
        %v1101 = vlaneseq
        %v1102 = vshrl.u32 %v1101, 7
        %v1103 = vsub.s32 3, %v1102
        %v1104 = vrot.slane %v655, %v1103
        %v1105 = vlaneseq
        %v1106 = vshrl.u32 %v1105, 7
        %v1107 = vsub.s32 3, %v1106
        %v1108 = vrot.slane %v656, %v1107
        %v1109 = vmul.f32 %v1099, %v1104
        %v1110 = vmul.f32 %v1099, %v1108
        %v1111 = vadd.f32 %v1095, %v1109
        %v1112 = vadd.f32 %v1096, %v1110
        %1113 = vset.pattern.permute.xlu0 28
        %1114 = vperm.xlu0 %1113, %v657
        %v1115 = vpop.permute.xlu0 %1114
        %v1117 = vlaneseq
        %v1118 = vshrl.u32 %v1117, 7
        %v1119 = vsub.s32 4, %v1118
        %v1120 = vrot.slane %v655, %v1119
        %v1121 = vlaneseq
        %v1122 = vshrl.u32 %v1121, 7
        %v1123 = vsub.s32 4, %v1122
        %v1124 = vrot.slane %v656, %v1123
        %v1125 = vmul.f32 %v1115, %v1120
        %v1126 = vmul.f32 %v1115, %v1124
        %v1127 = vadd.f32 %v1111, %v1125
        %v1128 = vadd.f32 %v1112, %v1126
        %1129 = vset.pattern.permute.xlu0 29
        %1130 = vperm.xlu0 %1129, %v657
        %v1131 = vpop.permute.xlu0 %1130
        %v1133 = vlaneseq
        %v1134 = vshrl.u32 %v1133, 7
        %v1135 = vsub.s32 5, %v1134
        %v1136 = vrot.slane %v655, %v1135
        %v1137 = vlaneseq
        %v1138 = vshrl.u32 %v1137, 7
        %v1139 = vsub.s32 5, %v1138
        %v1140 = vrot.slane %v656, %v1139
        %v1141 = vmul.f32 %v1131, %v1136
        %v1142 = vmul.f32 %v1131, %v1140
        %v1143 = vadd.f32 %v1127, %v1141
        %v1144 = vadd.f32 %v1128, %v1142
        %1145 = vset.pattern.permute.xlu0 30
        %1146 = vperm.xlu0 %1145, %v657
        %v1147 = vpop.permute.xlu0 %1146
        %v1149 = vlaneseq
        %v1150 = vshrl.u32 %v1149, 7
        %v1151 = vsub.s32 6, %v1150
        %v1152 = vrot.slane %v655, %v1151
        %v1153 = vlaneseq
        %v1154 = vshrl.u32 %v1153, 7
        %v1155 = vsub.s32 6, %v1154
        %v1156 = vrot.slane %v656, %v1155
        %v1157 = vmul.f32 %v1147, %v1152
        %v1158 = vmul.f32 %v1147, %v1156
        %v1159 = vadd.f32 %v1143, %v1157
        %v1160 = vadd.f32 %v1144, %v1158
        %1161 = vset.pattern.permute.xlu0 31
        %1162 = vperm.xlu0 %1161, %v657
        %v1163 = vpop.permute.xlu0 %1162
        %v1165 = vlaneseq
        %v1166 = vshrl.u32 %v1165, 7
        %v1167 = vsub.s32 7, %v1166
        %v1168 = vrot.slane %v655, %v1167
        %v1169 = vlaneseq
        %v1170 = vshrl.u32 %v1169, 7
        %v1171 = vsub.s32 7, %v1170
        %v1172 = vrot.slane %v656, %v1171
        %v1173 = vmul.f32 %v1163, %v1168
        %v1174 = vmul.f32 %v1163, %v1172
        %v1175 = vadd.f32 %v1159, %v1173
        %v1176 = vadd.f32 %v1160, %v1174
        %v1179 = vcombine.low %v1175, %v1176
        %1181 = vst [vmem:[%s271] sm:$0xff] %v1179
        %s1182 = sand.u32 %s181, 1
        %s1183 = scalar_lea.sflag [#allocation3], %s1182
        %s1184 = sand.u32 %s181, 1
        %s1185 = smul.addr %s1184, 8
        %s1186 = scalar_lea.vmem [#allocation2], %s1185
        // Predicated region
        $region49: #{tpu_custom_call.1} parent=47 // pred_check
          %p1187 = pneg %p191
        $region50: #{tpu_custom_call.1} parent=47 // pred_check_branch
          %1189 = sbr.rel (%p1187) target = $region52
        $region51: #{tpu_custom_call.1} parent=47 // pred_region
          %s1191 = ssub.s32 128, 128
          %1192 = vsyncadd %s1183, %s1191
          %s1193 = smul.addr %s21, 2
          %s1194 = smul.addr %s1193, 64
          %s1195 = scalar_lea.hbm %s7, %s1194
          %s1197 = sshll.u32 %s1186, 4
          %s1198 = int_to_ptr.vmem [resolvable:$true] %s1197
          %1200 = dma.vmem_to_hbm [thread:$0]  %s1198, 128, %s1195, %s1183
        $region52: #{tpu_custom_call.1} parent=47 // pred_fallthru
          _
      $region48: #{tpu_custom_call.1} parent=5 // pred_fallthru
        _
      %p1201 = scmp.le.s32.totalorder 2, %s16
      // Predicated region
      $region53: #{tpu_custom_call.1} parent=5 // pred_check
        %p1202 = pneg %p1201
      $region54: #{tpu_custom_call.1} parent=5 // pred_check_branch
        %1204 = sbr.rel (%p1202) target = $region56
      $region55: #{tpu_custom_call.1} parent=5 // pred_region
        %s1205 = ssub.s32 %s16, 2
        // Predicated region
        $region57: #{tpu_custom_call.1} parent=55 // pred_check
          %p1206 = pneg %p197
        $region58: #{tpu_custom_call.1} parent=55 // pred_check_branch
          %1208 = sbr.rel (%p1206) target = $region60
        $region59: #{tpu_custom_call.1} parent=55 // pred_region
          %s1209 = sand.u32 %s182, 1
          %s1210 = scalar_lea.sflag [#allocation3], %s1209
          %s1211 = sand.u32 %s182, 1
          %s1212 = smul.addr %s1211, 8
          %s1213 = scalar_lea.vmem [#allocation2], %s1212
          %1214 = dma.done %s1210, 128
        $region60: #{tpu_custom_call.1} parent=55 // pred_fallthru
          _
      $region56: #{tpu_custom_call.1} parent=5 // pred_fallthru
        _
    $region6: #{tpu_custom_call.1} parent=1 // loop_footer
      %s20 = sadd.s32 1, %s16
    $region7: #{tpu_custom_call.1} parent=1 // loop_footer_branch
      %15 = sbr.rel target = $region3
    $region8: #{tpu_custom_call.1} parent=1 // loop_exit
      _
    %1215 = vsyncpa [#allocation3], 1
    %s1216 = scalar_lea.sflag [#allocation3], 1
    %1217 = vsyncpa %s1216, 1

</llo_original>
